<compile_context>
chip_gen: v5e
topology: v5e:2x2
jax: 0.10.0
libtpu: 0.0.40
codegen_flags: <defaults>
</compile_context>

<pallas_src>
import functools

import jax
import jax.numpy as jnp
from jax.experimental import pallas as pl
from jax.experimental.pallas import tpu as pltpu


def _round_up(v, m):
    return ((v + m - 1) // m) * m


def _deephit_kernel(x_ref,
                    w1_ref, b1_ref,
                    w2_ref, b2_ref,
                    w3_ref, b3_ref,
                    w4_ref, b4_ref,
                    o_ref):
    # In-kernel bf16 cast of the activations (f32 stays in HBM; no wrapper pass).
    x = x_ref[...].astype(jnp.bfloat16)

    # fc1 + relu  (dropout1 is identity at inference)
    h = jnp.dot(x, w1_ref[...],
                preferred_element_type=jnp.float32) + b1_ref[...]
    h = jnp.maximum(h, 0.0).astype(jnp.bfloat16)

    # fc2 + relu  (dropout2 is identity at inference)
    h = jnp.dot(h, w2_ref[...],
                preferred_element_type=jnp.float32) + b2_ref[...]
    h = jnp.maximum(h, 0.0).astype(jnp.bfloat16)

    # fc3 + relu
    h = jnp.dot(h, w3_ref[...],
                preferred_element_type=jnp.float32) + b3_ref[...]
    h = jnp.maximum(h, 0.0).astype(jnp.bfloat16)

    # out head + softmax over the (unpadded) time-bin axis.
    logits = jnp.dot(h, w4_ref[...],
                     preferred_element_type=jnp.float32) + b4_ref[...]
    m = jnp.max(logits, axis=-1, keepdims=True)
    e = jnp.exp(logits - m)
    denom = jnp.sum(e, axis=-1, keepdims=True)
    # Exact divide: denom is a (bb, 1) column, so this costs ~nothing and keeps
    # row sums == 1 to f32 rounding (per correctness review).
    o_ref[...] = (e / denom).astype(o_ref.dtype)


@functools.partial(jax.jit, static_argnames=("block_b", "out_dtype"))
def deephit_forward(x, params, block_b=1024, out_dtype=jnp.float32):
    """x: (B, input_dim) float32; params: dict of transposed f32 weights/biases."""
    B, input_dim = x.shape
    h1 = params["w1"].shape[1]
    h2 = params["w2"].shape[1]
    h3 = params["w3"].shape[1]
    T = params["w4"].shape[1]

    # ---- Batch tile selection -------------------------------------------
    B128 = _round_up(B, 128)
    # Multiple of 128, capped at round_up(B,128) so tiny batches don't burn
    # MXU work on padding.
    bb = max(128, min(_round_up(block_b, 128), B128))
    # v7x VMEM headroom: per-tile temporaries ~10 MB at bb=2048, safely under
    # the 32 MiB default scoped limit on every generation.
    bb = min(bb, 2048)
    # v7x megacore: guarantee >= 2 grid steps whenever there are >= 2 full
    # 128-row tiles so dimension_semantics=("parallel",) can use both TCs.
    if B128 >= 256:
        half = (B128 // 2 // 128) * 128
        bb = min(bb, max(128, half))
    B_pad = _round_up(B, bb)
    if B_pad != B:
        x = jnp.pad(x, ((0, B_pad - B), (0, 0)))
    grid = (B_pad // bb,)

    # ---- Weight prep: bf16 MXU operands, f32 biases ---------------------
    w1 = params["w1"].astype(jnp.bfloat16)
    w2 = params["w2"].astype(jnp.bfloat16)
    w3 = params["w3"].astype(jnp.bfloat16)
    w4 = params["w4"].astype(jnp.bfloat16)

    # Weights/biases (<400 KB total) are resident across all grid steps
    # (constant index_map => no re-fetch).
    full = lambda shape: pl.BlockSpec(shape, lambda i: (0, 0))

    out_bytes = jnp.dtype(out_dtype).itemsize
    flops = 2 * B_pad * (input_dim * h1 + h1 * h2 + h2 * h3 + h3 * T)
    bytes_accessed = (
        B_pad * input_dim * 4                                   # x (f32)
        + 2 * (input_dim * h1 + h1 * h2 + h2 * h3 + h3 * T)     # weights (bf16)
        + 4 * (h1 + h2 + h3 + T)                                # biases (f32)
        + out_bytes * B_pad * T)                                # output
    cost = pl.CostEstimate(flops=flops,
                           transcendentals=B_pad * T,
                           bytes_accessed=bytes_accessed)

    out = pl.pallas_call(
        _deephit_kernel,
        out_shape=jax.ShapeDtypeStruct((B_pad, T), out_dtype),
        grid_spec=pltpu.PrefetchScalarGridSpec(
            num_scalar_prefetch=0,
            grid=grid,
            in_specs=[
                pl.BlockSpec((bb, input_dim), lambda i: (i, 0)),   # x tile
                full((input_dim, h1)), full((1, h1)),              # fc1
                full((h1, h2)),        full((1, h2)),              # fc2
                full((h2, h3)),        full((1, h3)),              # fc3
                full((h3, T)),         full((1, T)),               # out head
            ],
            out_specs=pl.BlockSpec((bb, T), lambda i: (i, 0)),
        ),
        compiler_params=pltpu.CompilerParams(
            dimension_semantics=("parallel",)),
        cost_estimate=cost,
    )(x,
      w1, params["b1"],
      w2, params["b2"],
      w3, params["b3"],
      w4, params["b4"])

    # Only the batch padding (if any) needs trimming; the T axis is unpadded.
    return out[:B] if B_pad != B else out


def init_params(key, input_dim, num_time_bins):
    """Deterministic synthetic init. Weights stored as (in, out), f32."""
    dims = [(input_dim, 512), (512, 256), (256, 128), (128, num_time_bins)]
    params = {}
    keys = jax.random.split(key, 2 * len(dims))
    for idx, (din, dout) in enumerate(dims):
        scale = 1.0 / jnp.sqrt(jnp.float32(din))
        params[f"w{idx + 1}"] = jax.random.uniform(
            keys[2 * idx], (din, dout), jnp.float32, -scale, scale)
        params[f"b{idx + 1}"] = jax.random.uniform(
            keys[2 * idx + 1], (1, dout), jnp.float32, -scale, scale)
    return params


def _reference_forward_f32(x, params):
    h = jnp.maximum(x @ params["w1"] + params["b1"], 0.0)
    h = jnp.maximum(h @ params["w2"] + params["b2"], 0.0)
    h = jnp.maximum(h @ params["w3"] + params["b3"], 0.0)
    logits = h @ params["w4"] + params["b4"]
    return jax.nn.softmax(logits, axis=1)


def _reference_forward_bf16(x, params):
    """Mimics the kernel's bf16-matmul / f32-accumulate numerics."""
    bf = jnp.bfloat16
    h = jnp.maximum(jnp.dot(x.astype(bf), params["w1"].astype(bf),
                            preferred_element_type=jnp.float32) + params["b1"], 0.0)
    h = jnp.maximum(jnp.dot(h.astype(bf), params["w2"].astype(bf),
                            preferred_element_type=jnp.float32) + params["b2"], 0.0)
    h = jnp.maximum(jnp.dot(h.astype(bf), params["w3"].astype(bf),
                            preferred_element_type=jnp.float32) + params["b3"], 0.0)
    logits = jnp.dot(h.astype(bf), params["w4"].astype(bf),
                     preferred_element_type=jnp.float32) + params["b4"]
    return jax.nn.softmax(logits, axis=1)


if __name__ == "__main__":
    key = jax.random.PRNGKey(0)
    k_x, k_p = jax.random.split(key)

    batch = 2
    input_dim = 16       # number of covariates (X_train.shape[1] analogue)
    num_time_bins = 8

    x = jax.random.normal(k_x, (batch, input_dim), jnp.float32)
    params = init_params(k_p, input_dim, num_time_bins)

    out = deephit_forward(x, params)
    jax.block_until_ready(out)

    ref_bf16 = _reference_forward_bf16(x, params)
    ref_f32 = _reference_forward_f32(x, params)

    assert out.shape == (batch, num_time_bins)
    # exact softmax divide => row sums are 1 to f32 rounding
    assert jnp.allclose(jnp.sum(out, axis=1), 1.0, atol=1e-4)
    # tight vs. a reference that mimics bf16-matmul numerics
    assert jnp.allclose(out, ref_bf16, atol=3e-3, rtol=3e-3)
    # loose vs. the pure-f32 PyTorch-equivalent reference (intentional bf16
    # matmul numerics change)
    assert jnp.allclose(out, ref_f32, atol=2e-2, rtol=2e-2)

    print("KERNEL_OK")
</pallas_src>

<mosaic_0001>
module attributes {stable_mosaic.version = 11 : i64} {
  func.func @_deephit_kernel(%arg0: i32, %arg1: memref<128x16xf32, #tpu.memory_space<vmem>>, %arg2: memref<16x512xbf16, #tpu.memory_space<vmem>>, %arg3: memref<1x512xf32, #tpu.memory_space<vmem>>, %arg4: memref<512x256xbf16, #tpu.memory_space<vmem>>, %arg5: memref<1x256xf32, #tpu.memory_space<vmem>>, %arg6: memref<256x128xbf16, #tpu.memory_space<vmem>>, %arg7: memref<1x128xf32, #tpu.memory_space<vmem>>, %arg8: memref<128x8xbf16, #tpu.memory_space<vmem>>, %arg9: memref<1x8xf32, #tpu.memory_space<vmem>>, %arg10: memref<128x8xf32, #tpu.memory_space<vmem>>) attributes {dimension_semantics = [#tpu.dimension_semantics<parallel>], iteration_bounds = array<i64: 1>, scalar_prefetch = 0 : i64, scratch_operands = 0 : i64, tpu.core_type = #tpu.core_type<tc>, window_params = [{transform_indices = @transform_0, window_bounds = array<i64: 128, 16>}, {pipeline_mode = #tpu.pipeline_mode<synchronous>, transform_indices = @transform_1, window_bounds = array<i64: 16, 512>}, {pipeline_mode = #tpu.pipeline_mode<synchronous>, transform_indices = @transform_2, window_bounds = array<i64: 1, 512>}, {pipeline_mode = #tpu.pipeline_mode<synchronous>, transform_indices = @transform_3, window_bounds = array<i64: 512, 256>}, {pipeline_mode = #tpu.pipeline_mode<synchronous>, transform_indices = @transform_4, window_bounds = array<i64: 1, 256>}, {pipeline_mode = #tpu.pipeline_mode<synchronous>, transform_indices = @transform_5, window_bounds = array<i64: 256, 128>}, {pipeline_mode = #tpu.pipeline_mode<synchronous>, transform_indices = @transform_6, window_bounds = array<i64: 1, 128>}, {pipeline_mode = #tpu.pipeline_mode<synchronous>, transform_indices = @transform_7, window_bounds = array<i64: 128, 8>}, {pipeline_mode = #tpu.pipeline_mode<synchronous>, transform_indices = @transform_8, window_bounds = array<i64: 1, 8>}, {transform_indices = @transform_9, window_bounds = array<i64: 128, 8>}]} {
    %c0 = arith.constant 0 : index
    %c0_0 = arith.constant 0 : index
    %0 = vector.load %arg1[%c0, %c0_0] : memref<128x16xf32, #tpu.memory_space<vmem>>, vector<128x16xf32>
    %1 = arith.truncf %0 : vector<128x16xf32> to vector<128x16xbf16>
    %c0_1 = arith.constant 0 : index
    %c0_2 = arith.constant 0 : index
    %2 = vector.load %arg2[%c0_1, %c0_2] : memref<16x512xbf16, #tpu.memory_space<vmem>>, vector<16x512xbf16>
    %cst = arith.constant dense<0.000000e+00> : vector<128x512xf32>
    %3 = tpu.matmul %1, %2, %cst {dimension_numbers = #tpu.dot_dimension_numbers<[1], [0], [0], [1], [0, 0, 1, 1], [], []>} : vector<128x16xbf16>, vector<16x512xbf16>, vector<128x512xf32> -> vector<128x512xf32>
    %c0_3 = arith.constant 0 : index
    %c0_4 = arith.constant 0 : index
    %4 = vector.load %arg3[%c0_3, %c0_4] : memref<1x512xf32, #tpu.memory_space<vmem>>, vector<1x512xf32>
    %5 = vector.broadcast %4 : vector<1x512xf32> to vector<128x512xf32>
    %6 = arith.addf %3, %5 : vector<128x512xf32>
    %cst_5 = arith.constant 0.000000e+00 : f32
    %7 = vector.broadcast %cst_5 : f32 to vector<128x512xf32>
    %8 = arith.maximumf %6, %7 : vector<128x512xf32>
    %9 = arith.truncf %8 : vector<128x512xf32> to vector<128x512xbf16>
    %c0_6 = arith.constant 0 : index
    %c0_7 = arith.constant 0 : index
    %10 = vector.load %arg4[%c0_6, %c0_7] : memref<512x256xbf16, #tpu.memory_space<vmem>>, vector<512x256xbf16>
    %cst_8 = arith.constant dense<0.000000e+00> : vector<128x256xf32>
    %11 = tpu.matmul %9, %10, %cst_8 {dimension_numbers = #tpu.dot_dimension_numbers<[1], [0], [0], [1], [0, 0, 1, 1], [], []>} : vector<128x512xbf16>, vector<512x256xbf16>, vector<128x256xf32> -> vector<128x256xf32>
    %c0_9 = arith.constant 0 : index
    %c0_10 = arith.constant 0 : index
    %12 = vector.load %arg5[%c0_9, %c0_10] : memref<1x256xf32, #tpu.memory_space<vmem>>, vector<1x256xf32>
    %13 = vector.broadcast %12 : vector<1x256xf32> to vector<128x256xf32>
    %14 = arith.addf %11, %13 : vector<128x256xf32>
    %cst_11 = arith.constant 0.000000e+00 : f32
    %15 = vector.broadcast %cst_11 : f32 to vector<128x256xf32>
    %16 = arith.maximumf %14, %15 : vector<128x256xf32>
    %17 = arith.truncf %16 : vector<128x256xf32> to vector<128x256xbf16>
    %c0_12 = arith.constant 0 : index
    %c0_13 = arith.constant 0 : index
    %18 = vector.load %arg6[%c0_12, %c0_13] : memref<256x128xbf16, #tpu.memory_space<vmem>>, vector<256x128xbf16>
    %cst_14 = arith.constant dense<0.000000e+00> : vector<128x128xf32>
    %19 = tpu.matmul %17, %18, %cst_14 {dimension_numbers = #tpu.dot_dimension_numbers<[1], [0], [0], [1], [0, 0, 1, 1], [], []>} : vector<128x256xbf16>, vector<256x128xbf16>, vector<128x128xf32> -> vector<128x128xf32>
    %c0_15 = arith.constant 0 : index
    %c0_16 = arith.constant 0 : index
    %20 = vector.load %arg7[%c0_15, %c0_16] : memref<1x128xf32, #tpu.memory_space<vmem>>, vector<1x128xf32>
    %21 = vector.broadcast %20 : vector<1x128xf32> to vector<128x128xf32>
    %22 = arith.addf %19, %21 : vector<128x128xf32>
    %cst_17 = arith.constant 0.000000e+00 : f32
    %23 = vector.broadcast %cst_17 : f32 to vector<128x128xf32>
    %24 = arith.maximumf %22, %23 : vector<128x128xf32>
    %25 = arith.truncf %24 : vector<128x128xf32> to vector<128x128xbf16>
    %c0_18 = arith.constant 0 : index
    %c0_19 = arith.constant 0 : index
    %26 = vector.load %arg8[%c0_18, %c0_19] : memref<128x8xbf16, #tpu.memory_space<vmem>>, vector<128x8xbf16>
    %cst_20 = arith.constant dense<0.000000e+00> : vector<128x8xf32>
    %27 = tpu.matmul %25, %26, %cst_20 {dimension_numbers = #tpu.dot_dimension_numbers<[1], [0], [0], [1], [0, 0, 1, 1], [], []>} : vector<128x128xbf16>, vector<128x8xbf16>, vector<128x8xf32> -> vector<128x8xf32>
    %c0_21 = arith.constant 0 : index
    %c0_22 = arith.constant 0 : index
    %28 = vector.load %arg9[%c0_21, %c0_22] : memref<1x8xf32, #tpu.memory_space<vmem>>, vector<1x8xf32>
    %29 = vector.broadcast %28 : vector<1x8xf32> to vector<128x8xf32>
    %30 = arith.addf %27, %29 : vector<128x8xf32>
    %cst_23 = arith.constant dense<0xFF800000> : vector<128xf32>
    %31 = vector.multi_reduction <maximumf>, %30, %cst_23 [1] : vector<128x8xf32> to vector<128xf32>
    %32 = vector.shape_cast %31 : vector<128xf32> to vector<128x1xf32>
    %33 = vector.broadcast %32 : vector<128x1xf32> to vector<128x8xf32>
    %34 = arith.subf %30, %33 : vector<128x8xf32>
    %35 = math.exp %34 : vector<128x8xf32>
    %cst_24 = arith.constant dense<0.000000e+00> : vector<128xf32>
    %36 = vector.multi_reduction <add>, %35, %cst_24 [1] : vector<128x8xf32> to vector<128xf32>
    %37 = vector.shape_cast %36 : vector<128xf32> to vector<128x1xf32>
    %38 = vector.broadcast %37 : vector<128x1xf32> to vector<128x8xf32>
    %39 = arith.divf %35, %38 : vector<128x8xf32>
    %c0_25 = arith.constant 0 : index
    %c0_26 = arith.constant 0 : index
    %40 = vector.load %arg10[%c0_25, %c0_26] : memref<128x8xf32, #tpu.memory_space<vmem>>, vector<128x8xf32>
    tpu.vector_store %arg10[%c0_25, %c0_26], %39 {strides = array<i32>} : memref<128x8xf32, #tpu.memory_space<vmem>>, vector<128x8xf32>,
    return
  }
  func.func @transform_0(%arg0: i32) -> (i32, i32) {
    %c0_i32 = arith.constant 0 : i32
    %c0_i32_0 = arith.constant 0 : i32
    return %arg0, %c0_i32 : i32, i32
  }
  func.func @transform_1(%arg0: i32) -> (i32, i32) {
    %c0_i32 = arith.constant 0 : i32
    %c0_i32_0 = arith.constant 0 : i32
    %c0_i32_1 = arith.constant 0 : i32
    return %c0_i32, %c0_i32_0 : i32, i32
  }
  func.func @transform_2(%arg0: i32) -> (i32, i32) {
    %c0_i32 = arith.constant 0 : i32
    %c0_i32_0 = arith.constant 0 : i32
    %c0_i32_1 = arith.constant 0 : i32
    return %c0_i32, %c0_i32_0 : i32, i32
  }
  func.func @transform_3(%arg0: i32) -> (i32, i32) {
    %c0_i32 = arith.constant 0 : i32
    %c0_i32_0 = arith.constant 0 : i32
    %c0_i32_1 = arith.constant 0 : i32
    return %c0_i32, %c0_i32_0 : i32, i32
  }
  func.func @transform_4(%arg0: i32) -> (i32, i32) {
    %c0_i32 = arith.constant 0 : i32
    %c0_i32_0 = arith.constant 0 : i32
    %c0_i32_1 = arith.constant 0 : i32
    return %c0_i32, %c0_i32_0 : i32, i32
  }
  func.func @transform_5(%arg0: i32) -> (i32, i32) {
    %c0_i32 = arith.constant 0 : i32
    %c0_i32_0 = arith.constant 0 : i32
    %c0_i32_1 = arith.constant 0 : i32
    return %c0_i32, %c0_i32_0 : i32, i32
  }
  func.func @transform_6(%arg0: i32) -> (i32, i32) {
    %c0_i32 = arith.constant 0 : i32
    %c0_i32_0 = arith.constant 0 : i32
    %c0_i32_1 = arith.constant 0 : i32
    return %c0_i32, %c0_i32_0 : i32, i32
  }
  func.func @transform_7(%arg0: i32) -> (i32, i32) {
    %c0_i32 = arith.constant 0 : i32
    %c0_i32_0 = arith.constant 0 : i32
    %c0_i32_1 = arith.constant 0 : i32
    return %c0_i32, %c0_i32_0 : i32, i32
  }
  func.func @transform_8(%arg0: i32) -> (i32, i32) {
    %c0_i32 = arith.constant 0 : i32
    %c0_i32_0 = arith.constant 0 : i32
    %c0_i32_1 = arith.constant 0 : i32
    return %c0_i32, %c0_i32_0 : i32, i32
  }
  func.func @transform_9(%arg0: i32) -> (i32, i32) {
    %c0_i32 = arith.constant 0 : i32
    %c0_i32_0 = arith.constant 0 : i32
    return %arg0, %c0_i32 : i32, i32
  }
}

</mosaic_0001>

<llo_original>
// kernel: deephit_forward.1
$region0: #{deephit_forward.1}
  #allocation0 [shape = 'u32[]', space=smem, size = 0x4, offset = 0x4, fixed_abs, tag = 'smem constant byte address 0x4 - core index']
  #allocation1 [shape = 'u32[72,128]{1,0:T(1,128)}', space=vmem, size = 0x9000, scoped, tag = 'internal scratch']
  %s0 = inlined_call_operand.vmem [shape: f32[128,16], index: 0, kind: input, shape index: {}]
  %s1 = inlined_call_operand.vmem [shape: bf16[16,512], index: 1, kind: input, shape index: {}]
  %s2 = inlined_call_operand.vmem [shape: f32[1,512], index: 2, kind: input, shape index: {}]
  %s3 = inlined_call_operand.vmem [shape: bf16[512,256], index: 3, kind: input, shape index: {}]
  %s4 = inlined_call_operand.vmem [shape: f32[1,256], index: 4, kind: input, shape index: {}]
  %s5 = inlined_call_operand.vmem [shape: bf16[256,128], index: 5, kind: input, shape index: {}]
  %s6 = inlined_call_operand.vmem [shape: f32[1,128], index: 6, kind: input, shape index: {}]
  %s7 = inlined_call_operand.vmem [shape: bf16[128,8], index: 7, kind: input, shape index: {}]
  %s8 = inlined_call_operand.vmem [shape: f32[1,8], index: 8, kind: input, shape index: {}]
  %s9 = inlined_call_operand.vmem [shape: f32[128,8], index: 9, kind: output, shape index: {}]
  %s10 = sld [smem:[#allocation0]]
  $region46: #{deephit_forward.1} parent=0
    _
  %s12 = ssub.s32 1, %s10
  %s13 = scalar_select 0, %s12, %s10
  // Predicated region
  $region2: #{deephit_forward.1} parent=0 // pred_check
    _
  $region3: #{deephit_forward.1} parent=0 // pred_check_branch
    %15 = sbr.rel (0) target = $region5
  $region4: #{deephit_forward.1} parent=0 // pred_region
    _
  $region5: #{deephit_forward.1} parent=0 // pred_fallthru
    _
  // Predicated region
  $region6: #{deephit_forward.1} parent=0 // pred_check
    _
  $region7: #{deephit_forward.1} parent=0 // pred_check_branch
    %17 = sbr.rel (0) target = $region9
  $region8: #{deephit_forward.1} parent=0 // pred_region
    _
  $region9: #{deephit_forward.1} parent=0 // pred_fallthru
    _
  // Predicated region
  $region10: #{deephit_forward.1} parent=0 // pred_check
    _
  $region11: #{deephit_forward.1} parent=0 // pred_check_branch
    %19 = sbr.rel (0) target = $region13
  $region12: #{deephit_forward.1} parent=0 // pred_region
    _
  $region13: #{deephit_forward.1} parent=0 // pred_fallthru
    _
  // Predicated region
  $region14: #{deephit_forward.1} parent=0 // pred_check
    _
  $region15: #{deephit_forward.1} parent=0 // pred_check_branch
    %21 = sbr.rel (0) target = $region17
  $region16: #{deephit_forward.1} parent=0 // pred_region
    _
  $region17: #{deephit_forward.1} parent=0 // pred_fallthru
    _
  // Predicated region
  $region18: #{deephit_forward.1} parent=0 // pred_check
    _
  $region19: #{deephit_forward.1} parent=0 // pred_check_branch
    %23 = sbr.rel (0) target = $region21
  $region20: #{deephit_forward.1} parent=0 // pred_region
    _
  $region21: #{deephit_forward.1} parent=0 // pred_fallthru
    _
  // Predicated region
  $region22: #{deephit_forward.1} parent=0 // pred_check
    _
  $region23: #{deephit_forward.1} parent=0 // pred_check_branch
    %25 = sbr.rel (0) target = $region25
  $region24: #{deephit_forward.1} parent=0 // pred_region
    _
  $region25: #{deephit_forward.1} parent=0 // pred_fallthru
    _
  // Predicated region
  $region26: #{deephit_forward.1} parent=0 // pred_check
    _
  $region27: #{deephit_forward.1} parent=0 // pred_check_branch
    %27 = sbr.rel (0) target = $region29
  $region28: #{deephit_forward.1} parent=0 // pred_region
    _
  $region29: #{deephit_forward.1} parent=0 // pred_fallthru
    _
  // Predicated region
  $region30: #{deephit_forward.1} parent=0 // pred_check
    _
  $region31: #{deephit_forward.1} parent=0 // pred_check_branch
    %29 = sbr.rel (0) target = $region33
  $region32: #{deephit_forward.1} parent=0 // pred_region
    _
  $region33: #{deephit_forward.1} parent=0 // pred_fallthru
    _
  // Predicated region
  $region34: #{deephit_forward.1} parent=0 // pred_check
    _
  $region35: #{deephit_forward.1} parent=0 // pred_check_branch
    %31 = sbr.rel (0) target = $region37
  $region36: #{deephit_forward.1} parent=0 // pred_region
    _
  $region37: #{deephit_forward.1} parent=0 // pred_fallthru
    _
  %v33 = vld [vmem:[%s0] sm:$0xff]
  %v34 = vld [vmem:[%s0 + $0x8] sm:$0xff]
  %v35 = vld [vmem:[%s0 + $0x10] sm:$0xff]
  %v36 = vld [vmem:[%s0 + $0x18] sm:$0xff]
  %v37 = vld [vmem:[%s0 + $0x20] sm:$0xff]
  %v38 = vld [vmem:[%s0 + $0x28] sm:$0xff]
  %v39 = vld [vmem:[%s0 + $0x30] sm:$0xff]
  %v40 = vld [vmem:[%s0 + $0x38] sm:$0xff]
  %v41 = vld [vmem:[%s0 + $0x40] sm:$0xff]
  %v42 = vld [vmem:[%s0 + $0x48] sm:$0xff]
  %v43 = vld [vmem:[%s0 + $0x50] sm:$0xff]
  %v44 = vld [vmem:[%s0 + $0x58] sm:$0xff]
  %v45 = vld [vmem:[%s0 + $0x60] sm:$0xff]
  %v46 = vld [vmem:[%s0 + $0x68] sm:$0xff]
  %v47 = vld [vmem:[%s0 + $0x70] sm:$0xff]
  %v48 = vld [vmem:[%s0 + $0x78] sm:$0xff]
  %v49 = vpack.c.bf16 %v34, %v33
  %v50 = vpack.c.bf16 %v36, %v35
  %v51 = vpack.c.bf16 %v38, %v37
  %v52 = vpack.c.bf16 %v40, %v39
  %v53 = vpack.c.bf16 %v42, %v41
  %v54 = vpack.c.bf16 %v44, %v43
  %v55 = vpack.c.bf16 %v46, %v45
  %v56 = vpack.c.bf16 %v48, %v47
  %v57 = vld [vmem:[%s1] sm:$0xff]
  %v58 = vld [vmem:[%s1 + $0x8] sm:$0xff]
  %v59 = vld [vmem:[%s1 + $0x10] sm:$0xff]
  %v60 = vld [vmem:[%s1 + $0x18] sm:$0xff]
  %v61 = vld [vmem:[%s2] sm:$0xf]
  %v63 = vperm.slane %v61, 0
  %v64 = vperm.slane %v61, 1
  %v65 = vperm.slane %v61, 2
  %v66 = vperm.slane %v61, 3
  %v75 = vunpack.c.l.b16 %v57
  %v76 = vunpack.c.h.b16 %v57
  %v77 = vunpack.c.l.b16 %v58
  %v78 = vunpack.c.h.b16 %v58
  %v79 = vunpack.c.l.b16 %v59
  %v80 = vunpack.c.h.b16 %v59
  %v81 = vunpack.c.l.b16 %v60
  %v82 = vunpack.c.h.b16 %v60
  %v83 = vpack.c.b16 %v79, %v75
  %v84 = vpack.c.b16 %v80, %v76
  %v85 = vpack.c.b16 %v81, %v77
  %v86 = vpack.c.b16 %v82, %v78
  %vm91 = vcmask 130048
  %v93 = vsel %vm91, %v49, 0
  %v96 = vsel %vm91, %v50, 0
  %v99 = vsel %vm91, %v51, 0
  %v102 = vsel %vm91, %v52, 0
  %v105 = vsel %vm91, %v53, 0
  %v108 = vsel %vm91, %v54, 0
  %v111 = vsel %vm91, %v55, 0
  %v114 = vsel %vm91, %v56, 0
  %116 = vmatpush.bf16.msra.mxu0 0
  %117 = vmatpush.bf16.msra.mxu0 0
  %118 = vmatpush.bf16.msra.mxu0 0
  %119 = vmatpush.bf16.msra.mxu0 0
  %120 = vmatpush.bf16.msra.mxu0 0
  %121 = vmatpush.bf16.msra.mxu0 0
  %122 = vmatpush.bf16.msra.mxu0 0
  %123 = vmatpush.bf16.msra.mxu0 %v83
  %124 = vmatmul.bf16.gmra.mxu0 %v93
  %v125 = vpop.f32.mrf.mxu0
  %v126 = vadd.f32 %v63, %v125
  %v127 = vpop.f32.mrf.mxu0
  %v128 = vadd.f32 %v63, %v127
  %129 = vmatmul.bf16.gmra.mxu0 %v96
  %v130 = vpop.f32.mrf.mxu0
  %v131 = vadd.f32 %v63, %v130
  %v132 = vpop.f32.mrf.mxu0
  %v133 = vadd.f32 %v63, %v132
  %134 = vmatmul.bf16.gmra.mxu0 %v99
  %v135 = vpop.f32.mrf.mxu0
  %v136 = vadd.f32 %v63, %v135
  %v137 = vpop.f32.mrf.mxu0
  %v138 = vadd.f32 %v63, %v137
  %139 = vmatmul.bf16.gmra.mxu0 %v102
  %v140 = vpop.f32.mrf.mxu0
  %v141 = vadd.f32 %v63, %v140
  %v142 = vpop.f32.mrf.mxu0
  %v143 = vadd.f32 %v63, %v142
  %144 = vmatmul.bf16.gmra.mxu0 %v105
  %v145 = vpop.f32.mrf.mxu0
  %v146 = vadd.f32 %v63, %v145
  %v147 = vpop.f32.mrf.mxu0
  %v148 = vadd.f32 %v63, %v147
  %149 = vmatmul.bf16.gmra.mxu0 %v108
  %v150 = vpop.f32.mrf.mxu0
  %v151 = vadd.f32 %v63, %v150
  %v152 = vpop.f32.mrf.mxu0
  %v153 = vadd.f32 %v63, %v152
  %154 = vmatmul.bf16.gmra.mxu0 %v111
  %v155 = vpop.f32.mrf.mxu0
  %v156 = vadd.f32 %v63, %v155
  %v157 = vpop.f32.mrf.mxu0
  %v158 = vadd.f32 %v63, %v157
  %159 = vmatmul.bf16.gmra.mxu0 %v114
  %v160 = vpop.f32.mrf.mxu0
  %v161 = vadd.f32 %v63, %v160
  %v162 = vpop.f32.mrf.mxu0
  %v163 = vadd.f32 %v63, %v162
  %164 = vdwg.mxu0
  %165 = vmatpush.bf16.msra.mxu0 0
  %166 = vmatpush.bf16.msra.mxu0 0
  %167 = vmatpush.bf16.msra.mxu0 0
  %168 = vmatpush.bf16.msra.mxu0 0
  %169 = vmatpush.bf16.msra.mxu0 0
  %170 = vmatpush.bf16.msra.mxu0 0
  %171 = vmatpush.bf16.msra.mxu0 0
  %172 = vmatpush.bf16.msra.mxu0 %v84
  %173 = vmatmul.bf16.gmra.mxu0 %v93
  %v174 = vpop.f32.mrf.mxu0
  %v175 = vadd.f32 %v64, %v174
  %v176 = vpop.f32.mrf.mxu0
  %v177 = vadd.f32 %v64, %v176
  %178 = vmatmul.bf16.gmra.mxu0 %v96
  %v179 = vpop.f32.mrf.mxu0
  %v180 = vadd.f32 %v64, %v179
  %v181 = vpop.f32.mrf.mxu0
  %v182 = vadd.f32 %v64, %v181
  %183 = vmatmul.bf16.gmra.mxu0 %v99
  %v184 = vpop.f32.mrf.mxu0
  %v185 = vadd.f32 %v64, %v184
  %v186 = vpop.f32.mrf.mxu0
  %v187 = vadd.f32 %v64, %v186
  %188 = vmatmul.bf16.gmra.mxu0 %v102
  %v189 = vpop.f32.mrf.mxu0
  %v190 = vadd.f32 %v64, %v189
  %v191 = vpop.f32.mrf.mxu0
  %v192 = vadd.f32 %v64, %v191
  %193 = vmatmul.bf16.gmra.mxu0 %v105
  %v194 = vpop.f32.mrf.mxu0
  %v195 = vadd.f32 %v64, %v194
  %v196 = vpop.f32.mrf.mxu0
  %v197 = vadd.f32 %v64, %v196
  %198 = vmatmul.bf16.gmra.mxu0 %v108
  %v199 = vpop.f32.mrf.mxu0
  %v200 = vadd.f32 %v64, %v199
  %v201 = vpop.f32.mrf.mxu0
  %v202 = vadd.f32 %v64, %v201
  %203 = vmatmul.bf16.gmra.mxu0 %v111
  %v204 = vpop.f32.mrf.mxu0
  %v205 = vadd.f32 %v64, %v204
  %v206 = vpop.f32.mrf.mxu0
  %v207 = vadd.f32 %v64, %v206
  %208 = vmatmul.bf16.gmra.mxu0 %v114
  %v209 = vpop.f32.mrf.mxu0
  %v210 = vadd.f32 %v64, %v209
  %v211 = vpop.f32.mrf.mxu0
  %v212 = vadd.f32 %v64, %v211
  %213 = vdwg.mxu0
  %214 = vmatpush.bf16.msra.mxu0 0
  %215 = vmatpush.bf16.msra.mxu0 0
  %216 = vmatpush.bf16.msra.mxu0 0
  %217 = vmatpush.bf16.msra.mxu0 0
  %218 = vmatpush.bf16.msra.mxu0 0
  %219 = vmatpush.bf16.msra.mxu0 0
  %220 = vmatpush.bf16.msra.mxu0 0
  %221 = vmatpush.bf16.msra.mxu0 %v85
  %222 = vmatmul.bf16.gmra.mxu0 %v93
  %v223 = vpop.f32.mrf.mxu0
  %v224 = vadd.f32 %v65, %v223
  %v225 = vpop.f32.mrf.mxu0
  %v226 = vadd.f32 %v65, %v225
  %227 = vmatmul.bf16.gmra.mxu0 %v96
  %v228 = vpop.f32.mrf.mxu0
  %v229 = vadd.f32 %v65, %v228
  %v230 = vpop.f32.mrf.mxu0
  %v231 = vadd.f32 %v65, %v230
  %232 = vmatmul.bf16.gmra.mxu0 %v99
  %v233 = vpop.f32.mrf.mxu0
  %v234 = vadd.f32 %v65, %v233
  %v235 = vpop.f32.mrf.mxu0
  %v236 = vadd.f32 %v65, %v235
  %237 = vmatmul.bf16.gmra.mxu0 %v102
  %v238 = vpop.f32.mrf.mxu0
  %v239 = vadd.f32 %v65, %v238
  %v240 = vpop.f32.mrf.mxu0
  %v241 = vadd.f32 %v65, %v240
  %242 = vmatmul.bf16.gmra.mxu0 %v105
  %v243 = vpop.f32.mrf.mxu0
  %v244 = vadd.f32 %v65, %v243
  %v245 = vpop.f32.mrf.mxu0
  %v246 = vadd.f32 %v65, %v245
  %247 = vmatmul.bf16.gmra.mxu0 %v108
  %v248 = vpop.f32.mrf.mxu0
  %v249 = vadd.f32 %v65, %v248
  %v250 = vpop.f32.mrf.mxu0
  %v251 = vadd.f32 %v65, %v250
  %252 = vmatmul.bf16.gmra.mxu0 %v111
  %v253 = vpop.f32.mrf.mxu0
  %v254 = vadd.f32 %v65, %v253
  %v255 = vpop.f32.mrf.mxu0
  %v256 = vadd.f32 %v65, %v255
  %257 = vmatmul.bf16.gmra.mxu0 %v114
  %v258 = vpop.f32.mrf.mxu0
  %v259 = vadd.f32 %v65, %v258
  %v260 = vpop.f32.mrf.mxu0
  %v261 = vadd.f32 %v65, %v260
  %262 = vdwg.mxu0
  %263 = vmatpush.bf16.msra.mxu0 0
  %264 = vmatpush.bf16.msra.mxu0 0
  %265 = vmatpush.bf16.msra.mxu0 0
  %266 = vmatpush.bf16.msra.mxu0 0
  %267 = vmatpush.bf16.msra.mxu0 0
  %268 = vmatpush.bf16.msra.mxu0 0
  %269 = vmatpush.bf16.msra.mxu0 0
  %270 = vmatpush.bf16.msra.mxu0 %v86
  %271 = vmatmul.bf16.gmra.mxu0 %v93
  %v272 = vpop.f32.mrf.mxu0
  %v273 = vadd.f32 %v66, %v272
  %v274 = vpop.f32.mrf.mxu0
  %v275 = vadd.f32 %v66, %v274
  %276 = vmatmul.bf16.gmra.mxu0 %v96
  %v277 = vpop.f32.mrf.mxu0
  %v278 = vadd.f32 %v66, %v277
  %v279 = vpop.f32.mrf.mxu0
  %v280 = vadd.f32 %v66, %v279
  %281 = vmatmul.bf16.gmra.mxu0 %v99
  %v282 = vpop.f32.mrf.mxu0
  %v283 = vadd.f32 %v66, %v282
  %v284 = vpop.f32.mrf.mxu0
  %v285 = vadd.f32 %v66, %v284
  %286 = vmatmul.bf16.gmra.mxu0 %v102
  %v287 = vpop.f32.mrf.mxu0
  %v288 = vadd.f32 %v66, %v287
  %v289 = vpop.f32.mrf.mxu0
  %v290 = vadd.f32 %v66, %v289
  %291 = vmatmul.bf16.gmra.mxu0 %v105
  %v292 = vpop.f32.mrf.mxu0
  %v293 = vadd.f32 %v66, %v292
  %v294 = vpop.f32.mrf.mxu0
  %v295 = vadd.f32 %v66, %v294
  %296 = vmatmul.bf16.gmra.mxu0 %v108
  %v297 = vpop.f32.mrf.mxu0
  %v298 = vadd.f32 %v66, %v297
  %v299 = vpop.f32.mrf.mxu0
  %v300 = vadd.f32 %v66, %v299
  %301 = vmatmul.bf16.gmra.mxu0 %v111
  %v302 = vpop.f32.mrf.mxu0
  %v303 = vadd.f32 %v66, %v302
  %v304 = vpop.f32.mrf.mxu0
  %v305 = vadd.f32 %v66, %v304
  %306 = vmatmul.bf16.gmra.mxu0 %v114
  %v307 = vpop.f32.mrf.mxu0
  %v308 = vadd.f32 %v66, %v307
  %v309 = vpop.f32.mrf.mxu0
  %v310 = vadd.f32 %v66, %v309
  %311 = vdwg.mxu0
  %v312 = vmax.f32 %v126, 0.0
  %v313 = vmax.f32 %v175, 0.0
  %v314 = vmax.f32 %v224, 0.0
  %v315 = vmax.f32 %v273, 0.0
  %v316 = vmax.f32 %v128, 0.0
  %v317 = vmax.f32 %v177, 0.0
  %v318 = vmax.f32 %v226, 0.0
  %v319 = vmax.f32 %v275, 0.0
  %v320 = vmax.f32 %v131, 0.0
  %v321 = vmax.f32 %v180, 0.0
  %v322 = vmax.f32 %v229, 0.0
  %v323 = vmax.f32 %v278, 0.0
  %v324 = vmax.f32 %v133, 0.0
  %v325 = vmax.f32 %v182, 0.0
  %v326 = vmax.f32 %v231, 0.0
  %v327 = vmax.f32 %v280, 0.0
  %v328 = vmax.f32 %v136, 0.0
  %v329 = vmax.f32 %v185, 0.0
  %v330 = vmax.f32 %v234, 0.0
  %v331 = vmax.f32 %v283, 0.0
  %v332 = vmax.f32 %v138, 0.0
  %v333 = vmax.f32 %v187, 0.0
  %v334 = vmax.f32 %v236, 0.0
  %v335 = vmax.f32 %v285, 0.0
  %v336 = vmax.f32 %v141, 0.0
  %v337 = vmax.f32 %v190, 0.0
  %v338 = vmax.f32 %v239, 0.0
  %v339 = vmax.f32 %v288, 0.0
  %v340 = vmax.f32 %v143, 0.0
  %v341 = vmax.f32 %v192, 0.0
  %v342 = vmax.f32 %v241, 0.0
  %v343 = vmax.f32 %v290, 0.0
  %v344 = vmax.f32 %v146, 0.0
  %v345 = vmax.f32 %v195, 0.0
  %v346 = vmax.f32 %v244, 0.0
  %v347 = vmax.f32 %v293, 0.0
  %v348 = vmax.f32 %v148, 0.0
  %v349 = vmax.f32 %v197, 0.0
  %v350 = vmax.f32 %v246, 0.0
  %v351 = vmax.f32 %v295, 0.0
  %v352 = vmax.f32 %v151, 0.0
  %v353 = vmax.f32 %v200, 0.0
  %v354 = vmax.f32 %v249, 0.0
  %v355 = vmax.f32 %v298, 0.0
  %v356 = vmax.f32 %v153, 0.0
  %v357 = vmax.f32 %v202, 0.0
  %v358 = vmax.f32 %v251, 0.0
  %v359 = vmax.f32 %v300, 0.0
  %v360 = vmax.f32 %v156, 0.0
  %v361 = vmax.f32 %v205, 0.0
  %v362 = vmax.f32 %v254, 0.0
  %v363 = vmax.f32 %v303, 0.0
  %v364 = vmax.f32 %v158, 0.0
  %v365 = vmax.f32 %v207, 0.0
  %v366 = vmax.f32 %v256, 0.0
  %v367 = vmax.f32 %v305, 0.0
  %v368 = vmax.f32 %v161, 0.0
  %v369 = vmax.f32 %v210, 0.0
  %v370 = vmax.f32 %v259, 0.0
  %v371 = vmax.f32 %v308, 0.0
  %v372 = vmax.f32 %v163, 0.0
  %v373 = vmax.f32 %v212, 0.0
  %v374 = vmax.f32 %v261, 0.0
  %v375 = vmax.f32 %v310, 0.0
  %v376 = vpack.c.bf16 %v316, %v312
  %v377 = vpack.c.bf16 %v317, %v313
  %v378 = vpack.c.bf16 %v318, %v314
  %v379 = vpack.c.bf16 %v319, %v315
  %v380 = vpack.c.bf16 %v324, %v320
  %v381 = vpack.c.bf16 %v325, %v321
  %v382 = vpack.c.bf16 %v326, %v322
  %v383 = vpack.c.bf16 %v327, %v323
  %v384 = vpack.c.bf16 %v332, %v328
  %v385 = vpack.c.bf16 %v333, %v329
  %v386 = vpack.c.bf16 %v334, %v330
  %v387 = vpack.c.bf16 %v335, %v331
  %v388 = vpack.c.bf16 %v340, %v336
  %v389 = vpack.c.bf16 %v341, %v337
  %v390 = vpack.c.bf16 %v342, %v338
  %v391 = vpack.c.bf16 %v343, %v339
  %v392 = vpack.c.bf16 %v348, %v344
  %v393 = vpack.c.bf16 %v349, %v345
  %v394 = vpack.c.bf16 %v350, %v346
  %v395 = vpack.c.bf16 %v351, %v347
  %v396 = vpack.c.bf16 %v356, %v352
  %v397 = vpack.c.bf16 %v357, %v353
  %v398 = vpack.c.bf16 %v358, %v354
  %v399 = vpack.c.bf16 %v359, %v355
  %v400 = vpack.c.bf16 %v364, %v360
  %v401 = vpack.c.bf16 %v365, %v361
  %v402 = vpack.c.bf16 %v366, %v362
  %v403 = vpack.c.bf16 %v367, %v363
  %v404 = vpack.c.bf16 %v372, %v368
  %v405 = vpack.c.bf16 %v373, %v369
  %v406 = vpack.c.bf16 %v374, %v370
  %v407 = vpack.c.bf16 %v375, %v371
  %v408 = vld [vmem:[%s3] sm:$0xff]
  %v409 = vld [vmem:[%s3 + $0x8] sm:$0xff]
  %v410 = vld [vmem:[%s3 + $0x10] sm:$0xff]
  %v411 = vld [vmem:[%s3 + $0x18] sm:$0xff]
  %v412 = vld [vmem:[%s3 + $0x20] sm:$0xff]
  %v413 = vld [vmem:[%s3 + $0x28] sm:$0xff]
  %v414 = vld [vmem:[%s3 + $0x30] sm:$0xff]
  %v415 = vld [vmem:[%s3 + $0x38] sm:$0xff]
  %v416 = vld [vmem:[%s3 + $0x40] sm:$0xff]
  %v417 = vld [vmem:[%s3 + $0x48] sm:$0xff]
  %v418 = vld [vmem:[%s3 + $0x50] sm:$0xff]
  %v419 = vld [vmem:[%s3 + $0x58] sm:$0xff]
  %v420 = vld [vmem:[%s3 + $0x60] sm:$0xff]
  %v421 = vld [vmem:[%s3 + $0x68] sm:$0xff]
  %v422 = vld [vmem:[%s3 + $0x70] sm:$0xff]
  %v423 = vld [vmem:[%s3 + $0x78] sm:$0xff]
  %v424 = vld [vmem:[%s3 + $0x80] sm:$0xff]
  %v425 = vld [vmem:[%s3 + $0x88] sm:$0xff]
  %v426 = vld [vmem:[%s3 + $0x90] sm:$0xff]
  %v427 = vld [vmem:[%s3 + $0x98] sm:$0xff]
  %v428 = vld [vmem:[%s3 + $0xa0] sm:$0xff]
  %v429 = vld [vmem:[%s3 + $0xa8] sm:$0xff]
  %v430 = vld [vmem:[%s3 + $0xb0] sm:$0xff]
  %v431 = vld [vmem:[%s3 + $0xb8] sm:$0xff]
  %v432 = vld [vmem:[%s3 + $0xc0] sm:$0xff]
  %v433 = vld [vmem:[%s3 + $0xc8] sm:$0xff]
  %v434 = vld [vmem:[%s3 + $0xd0] sm:$0xff]
  %v435 = vld [vmem:[%s3 + $0xd8] sm:$0xff]
  %v436 = vld [vmem:[%s3 + $0xe0] sm:$0xff]
  %v437 = vld [vmem:[%s3 + $0xe8] sm:$0xff]
  %v438 = vld [vmem:[%s3 + $0xf0] sm:$0xff]
  %v439 = vld [vmem:[%s3 + $0xf8] sm:$0xff]
  %v440 = vld [vmem:[%s3 + $0x100] sm:$0xff]
  %v441 = vld [vmem:[%s3 + $0x108] sm:$0xff]
  %v442 = vld [vmem:[%s3 + $0x110] sm:$0xff]
  %v443 = vld [vmem:[%s3 + $0x118] sm:$0xff]
  %v444 = vld [vmem:[%s3 + $0x120] sm:$0xff]
  %v445 = vld [vmem:[%s3 + $0x128] sm:$0xff]
  %v446 = vld [vmem:[%s3 + $0x130] sm:$0xff]
  %v447 = vld [vmem:[%s3 + $0x138] sm:$0xff]
  %v448 = vld [vmem:[%s3 + $0x140] sm:$0xff]
  %v449 = vld [vmem:[%s3 + $0x148] sm:$0xff]
  %v450 = vld [vmem:[%s3 + $0x150] sm:$0xff]
  %v451 = vld [vmem:[%s3 + $0x158] sm:$0xff]
  %v452 = vld [vmem:[%s3 + $0x160] sm:$0xff]
  %v453 = vld [vmem:[%s3 + $0x168] sm:$0xff]
  %v454 = vld [vmem:[%s3 + $0x170] sm:$0xff]
  %v455 = vld [vmem:[%s3 + $0x178] sm:$0xff]
  %v456 = vld [vmem:[%s3 + $0x180] sm:$0xff]
  %v457 = vld [vmem:[%s3 + $0x188] sm:$0xff]
  %v458 = vld [vmem:[%s3 + $0x190] sm:$0xff]
  %v459 = vld [vmem:[%s3 + $0x198] sm:$0xff]
  %v460 = vld [vmem:[%s3 + $0x1a0] sm:$0xff]
  %v461 = vld [vmem:[%s3 + $0x1a8] sm:$0xff]
  %v462 = vld [vmem:[%s3 + $0x1b0] sm:$0xff]
  %v463 = vld [vmem:[%s3 + $0x1b8] sm:$0xff]
  %v464 = vld [vmem:[%s3 + $0x1c0] sm:$0xff]
  %v465 = vld [vmem:[%s3 + $0x1c8] sm:$0xff]
  %v466 = vld [vmem:[%s3 + $0x1d0] sm:$0xff]
  %v467 = vld [vmem:[%s3 + $0x1d8] sm:$0xff]
  %v468 = vld [vmem:[%s3 + $0x1e0] sm:$0xff]
  %v469 = vld [vmem:[%s3 + $0x1e8] sm:$0xff]
  %v470 = vld [vmem:[%s3 + $0x1f0] sm:$0xff]
  %v471 = vld [vmem:[%s3 + $0x1f8] sm:$0xff]
  %v472 = vld [vmem:[%s4] sm:$0x3]
  %v474 = vperm.slane %v472, 0
  %v475 = vperm.slane %v472, 1
  %v542 = vunpack.c.l.b16 %v408
  %v543 = vunpack.c.h.b16 %v408
  %v544 = vunpack.c.l.b16 %v409
  %v545 = vunpack.c.h.b16 %v409
  %v546 = vunpack.c.l.b16 %v410
  %v547 = vunpack.c.h.b16 %v410
  %v548 = vunpack.c.l.b16 %v411
  %v549 = vunpack.c.h.b16 %v411
  %v550 = vunpack.c.l.b16 %v412
  %v551 = vunpack.c.h.b16 %v412
  %v552 = vunpack.c.l.b16 %v413
  %v553 = vunpack.c.h.b16 %v413
  %v554 = vunpack.c.l.b16 %v414
  %v555 = vunpack.c.h.b16 %v414
  %v556 = vunpack.c.l.b16 %v415
  %v557 = vunpack.c.h.b16 %v415
  %v558 = vunpack.c.l.b16 %v416
  %v559 = vunpack.c.h.b16 %v416
  %v560 = vunpack.c.l.b16 %v417
  %v561 = vunpack.c.h.b16 %v417
  %v562 = vunpack.c.l.b16 %v418
  %v563 = vunpack.c.h.b16 %v418
  %v564 = vunpack.c.l.b16 %v419
  %v565 = vunpack.c.h.b16 %v419
  %v566 = vunpack.c.l.b16 %v420
  %v567 = vunpack.c.h.b16 %v420
  %v568 = vunpack.c.l.b16 %v421
  %v569 = vunpack.c.h.b16 %v421
  %v570 = vunpack.c.l.b16 %v422
  %v571 = vunpack.c.h.b16 %v422
  %v572 = vunpack.c.l.b16 %v423
  %v573 = vunpack.c.h.b16 %v423
  %v574 = vunpack.c.l.b16 %v424
  %v575 = vunpack.c.h.b16 %v424
  %v576 = vunpack.c.l.b16 %v425
  %v577 = vunpack.c.h.b16 %v425
  %v578 = vunpack.c.l.b16 %v426
  %v579 = vunpack.c.h.b16 %v426
  %v580 = vunpack.c.l.b16 %v427
  %v581 = vunpack.c.h.b16 %v427
  %v582 = vunpack.c.l.b16 %v428
  %v583 = vunpack.c.h.b16 %v428
  %v584 = vunpack.c.l.b16 %v429
  %v585 = vunpack.c.h.b16 %v429
  %v586 = vunpack.c.l.b16 %v430
  %v587 = vunpack.c.h.b16 %v430
  %v588 = vunpack.c.l.b16 %v431
  %v589 = vunpack.c.h.b16 %v431
  %v590 = vunpack.c.l.b16 %v432
  %v591 = vunpack.c.h.b16 %v432
  %v592 = vunpack.c.l.b16 %v433
  %v593 = vunpack.c.h.b16 %v433
  %v594 = vunpack.c.l.b16 %v434
  %v595 = vunpack.c.h.b16 %v434
  %v596 = vunpack.c.l.b16 %v435
  %v597 = vunpack.c.h.b16 %v435
  %v598 = vunpack.c.l.b16 %v436
  %v599 = vunpack.c.h.b16 %v436
  %v600 = vunpack.c.l.b16 %v437
  %v601 = vunpack.c.h.b16 %v437
  %v602 = vunpack.c.l.b16 %v438
  %v603 = vunpack.c.h.b16 %v438
  %v604 = vunpack.c.l.b16 %v439
  %v605 = vunpack.c.h.b16 %v439
  %v606 = vunpack.c.l.b16 %v440
  %v607 = vunpack.c.h.b16 %v440
  %v608 = vunpack.c.l.b16 %v441
  %v609 = vunpack.c.h.b16 %v441
  %v610 = vunpack.c.l.b16 %v442
  %v611 = vunpack.c.h.b16 %v442
  %v612 = vunpack.c.l.b16 %v443
  %v613 = vunpack.c.h.b16 %v443
  %v614 = vunpack.c.l.b16 %v444
  %v615 = vunpack.c.h.b16 %v444
  %v616 = vunpack.c.l.b16 %v445
  %v617 = vunpack.c.h.b16 %v445
  %v618 = vunpack.c.l.b16 %v446
  %v619 = vunpack.c.h.b16 %v446
  %v620 = vunpack.c.l.b16 %v447
  %v621 = vunpack.c.h.b16 %v447
  %v622 = vunpack.c.l.b16 %v448
  %v623 = vunpack.c.h.b16 %v448
  %v624 = vunpack.c.l.b16 %v449
  %v625 = vunpack.c.h.b16 %v449
  %v626 = vunpack.c.l.b16 %v450
  %v627 = vunpack.c.h.b16 %v450
  %v628 = vunpack.c.l.b16 %v451
  %v629 = vunpack.c.h.b16 %v451
  %v630 = vunpack.c.l.b16 %v452
  %v631 = vunpack.c.h.b16 %v452
  %v632 = vunpack.c.l.b16 %v453
  %v633 = vunpack.c.h.b16 %v453
  %v634 = vunpack.c.l.b16 %v454
  %v635 = vunpack.c.h.b16 %v454
  %v636 = vunpack.c.l.b16 %v455
  %v637 = vunpack.c.h.b16 %v455
  %v638 = vunpack.c.l.b16 %v456
  %v639 = vunpack.c.h.b16 %v456
  %v640 = vunpack.c.l.b16 %v457
  %v641 = vunpack.c.h.b16 %v457
  %v642 = vunpack.c.l.b16 %v458
  %v643 = vunpack.c.h.b16 %v458
  %v644 = vunpack.c.l.b16 %v459
  %v645 = vunpack.c.h.b16 %v459
  %v646 = vunpack.c.l.b16 %v460
  %v647 = vunpack.c.h.b16 %v460
  %v648 = vunpack.c.l.b16 %v461
  %v649 = vunpack.c.h.b16 %v461
  %v650 = vunpack.c.l.b16 %v462
  %v651 = vunpack.c.h.b16 %v462
  %v652 = vunpack.c.l.b16 %v463
  %v653 = vunpack.c.h.b16 %v463
  %v654 = vunpack.c.l.b16 %v464
  %v655 = vunpack.c.h.b16 %v464
  %v656 = vunpack.c.l.b16 %v465
  %v657 = vunpack.c.h.b16 %v465
  %v658 = vunpack.c.l.b16 %v466
  %v659 = vunpack.c.h.b16 %v466
  %v660 = vunpack.c.l.b16 %v467
  %v661 = vunpack.c.h.b16 %v467
  %v662 = vunpack.c.l.b16 %v468
  %v663 = vunpack.c.h.b16 %v468
  %v664 = vunpack.c.l.b16 %v469
  %v665 = vunpack.c.h.b16 %v469
  %v666 = vunpack.c.l.b16 %v470
  %v667 = vunpack.c.h.b16 %v470
  %v668 = vunpack.c.l.b16 %v471
  %v669 = vunpack.c.h.b16 %v471
  %v670 = vpack.c.b16 %v544, %v542
  %v671 = vpack.c.b16 %v545, %v543
  %v672 = vpack.c.b16 %v548, %v546
  %v673 = vpack.c.b16 %v549, %v547
  %v674 = vpack.c.b16 %v552, %v550
  %v675 = vpack.c.b16 %v553, %v551
  %v676 = vpack.c.b16 %v556, %v554
  %v677 = vpack.c.b16 %v557, %v555
  %v678 = vpack.c.b16 %v560, %v558
  %v679 = vpack.c.b16 %v561, %v559
  %v680 = vpack.c.b16 %v564, %v562
  %v681 = vpack.c.b16 %v565, %v563
  %v682 = vpack.c.b16 %v568, %v566
  %v683 = vpack.c.b16 %v569, %v567
  %v684 = vpack.c.b16 %v572, %v570
  %v685 = vpack.c.b16 %v573, %v571
  %v686 = vpack.c.b16 %v576, %v574
  %v687 = vpack.c.b16 %v577, %v575
  %v688 = vpack.c.b16 %v580, %v578
  %v689 = vpack.c.b16 %v581, %v579
  %v690 = vpack.c.b16 %v584, %v582
  %v691 = vpack.c.b16 %v585, %v583
  %v692 = vpack.c.b16 %v588, %v586
  %v693 = vpack.c.b16 %v589, %v587
  %v694 = vpack.c.b16 %v592, %v590
  %v695 = vpack.c.b16 %v593, %v591
  %v696 = vpack.c.b16 %v596, %v594
  %v697 = vpack.c.b16 %v597, %v595
  %v698 = vpack.c.b16 %v600, %v598
  %v699 = vpack.c.b16 %v601, %v599
  %v700 = vpack.c.b16 %v604, %v602
  %v701 = vpack.c.b16 %v605, %v603
  %v702 = vpack.c.b16 %v608, %v606
  %v703 = vpack.c.b16 %v609, %v607
  %v704 = vpack.c.b16 %v612, %v610
  %v705 = vpack.c.b16 %v613, %v611
  %v706 = vpack.c.b16 %v616, %v614
  %v707 = vpack.c.b16 %v617, %v615
  %v708 = vpack.c.b16 %v620, %v618
  %v709 = vpack.c.b16 %v621, %v619
  %v710 = vpack.c.b16 %v624, %v622
  %v711 = vpack.c.b16 %v625, %v623
  %v712 = vpack.c.b16 %v628, %v626
  %v713 = vpack.c.b16 %v629, %v627
  %v714 = vpack.c.b16 %v632, %v630
  %v715 = vpack.c.b16 %v633, %v631
  %v716 = vpack.c.b16 %v636, %v634
  %v717 = vpack.c.b16 %v637, %v635
  %v718 = vpack.c.b16 %v640, %v638
  %v719 = vpack.c.b16 %v641, %v639
  %v720 = vpack.c.b16 %v644, %v642
  %v721 = vpack.c.b16 %v645, %v643
  %v722 = vpack.c.b16 %v648, %v646
  %v723 = vpack.c.b16 %v649, %v647
  %v724 = vpack.c.b16 %v652, %v650
  %v725 = vpack.c.b16 %v653, %v651
  %v726 = vpack.c.b16 %v656, %v654
  %v727 = vpack.c.b16 %v657, %v655
  %v728 = vpack.c.b16 %v660, %v658
  %v729 = vpack.c.b16 %v661, %v659
  %v730 = vpack.c.b16 %v664, %v662
  %v731 = vpack.c.b16 %v665, %v663
  %v732 = vpack.c.b16 %v668, %v666
  %v733 = vpack.c.b16 %v669, %v667
  %798 = vmatpush.bf16.msra.mxu0 %v684
  %799 = vmatpush.bf16.msra.mxu0 %v682
  %800 = vmatpush.bf16.msra.mxu0 %v680
  %801 = vmatpush.bf16.msra.mxu0 %v678
  %802 = vmatpush.bf16.msra.mxu0 %v676
  %803 = vmatpush.bf16.msra.mxu0 %v674
  %804 = vmatpush.bf16.msra.mxu0 %v672
  %805 = vmatpush.bf16.msra.mxu0 %v670
  %806 = vmatmul.bf16.gmra.mxu0 %v376
  %v807 = vpop.f32.mrf.mxu0
  %v808 = vadd.f32 %v474, %v807
  %v809 = vpop.f32.mrf.mxu0
  %v810 = vadd.f32 %v474, %v809
  %811 = vmatmul.bf16.gmra.mxu0 %v380
  %v812 = vpop.f32.mrf.mxu0
  %v813 = vadd.f32 %v474, %v812
  %v814 = vpop.f32.mrf.mxu0
  %v815 = vadd.f32 %v474, %v814
  %816 = vmatmul.bf16.gmra.mxu0 %v384
  %v817 = vpop.f32.mrf.mxu0
  %v818 = vadd.f32 %v474, %v817
  %v819 = vpop.f32.mrf.mxu0
  %v820 = vadd.f32 %v474, %v819
  %821 = vmatmul.bf16.gmra.mxu0 %v388
  %v822 = vpop.f32.mrf.mxu0
  %v823 = vadd.f32 %v474, %v822
  %v824 = vpop.f32.mrf.mxu0
  %v825 = vadd.f32 %v474, %v824
  %826 = vmatmul.bf16.gmra.mxu0 %v392
  %v827 = vpop.f32.mrf.mxu0
  %v828 = vadd.f32 %v474, %v827
  %v829 = vpop.f32.mrf.mxu0
  %v830 = vadd.f32 %v474, %v829
  %831 = vmatmul.bf16.gmra.mxu0 %v396
  %v832 = vpop.f32.mrf.mxu0
  %v833 = vadd.f32 %v474, %v832
  %v834 = vpop.f32.mrf.mxu0
  %v835 = vadd.f32 %v474, %v834
  %836 = vmatmul.bf16.gmra.mxu0 %v400
  %v837 = vpop.f32.mrf.mxu0
  %v838 = vadd.f32 %v474, %v837
  %v839 = vpop.f32.mrf.mxu0
  %v840 = vadd.f32 %v474, %v839
  %841 = vmatmul.bf16.gmra.mxu0 %v404
  %v842 = vpop.f32.mrf.mxu0
  %v843 = vadd.f32 %v474, %v842
  %v844 = vpop.f32.mrf.mxu0
  %v845 = vadd.f32 %v474, %v844
  %846 = vdwg.mxu0
  %847 = vmatpush.bf16.msra.mxu0 %v700
  %848 = vmatpush.bf16.msra.mxu0 %v698
  %849 = vmatpush.bf16.msra.mxu0 %v696
  %850 = vmatpush.bf16.msra.mxu0 %v694
  %851 = vmatpush.bf16.msra.mxu0 %v692
  %852 = vmatpush.bf16.msra.mxu0 %v690
  %853 = vmatpush.bf16.msra.mxu0 %v688
  %854 = vmatpush.bf16.msra.mxu0 %v686
  %855 = vmatmul.bf16.gmra.mxu0 %v377
  %v856 = vpop.f32.mrf.mxu0
  %v857 = vadd.f32 %v808, %v856
  %v858 = vpop.f32.mrf.mxu0
  %v859 = vadd.f32 %v810, %v858
  %860 = vmatmul.bf16.gmra.mxu0 %v381
  %v861 = vpop.f32.mrf.mxu0
  %v862 = vadd.f32 %v813, %v861
  %v863 = vpop.f32.mrf.mxu0
  %v864 = vadd.f32 %v815, %v863
  %865 = vmatmul.bf16.gmra.mxu0 %v385
  %v866 = vpop.f32.mrf.mxu0
  %v867 = vadd.f32 %v818, %v866
  %v868 = vpop.f32.mrf.mxu0
  %v869 = vadd.f32 %v820, %v868
  %870 = vmatmul.bf16.gmra.mxu0 %v389
  %v871 = vpop.f32.mrf.mxu0
  %v872 = vadd.f32 %v823, %v871
  %v873 = vpop.f32.mrf.mxu0
  %v874 = vadd.f32 %v825, %v873
  %875 = vmatmul.bf16.gmra.mxu0 %v393
  %v876 = vpop.f32.mrf.mxu0
  %v877 = vadd.f32 %v828, %v876
  %v878 = vpop.f32.mrf.mxu0
  %v879 = vadd.f32 %v830, %v878
  %880 = vmatmul.bf16.gmra.mxu0 %v397
  %v881 = vpop.f32.mrf.mxu0
  %v882 = vadd.f32 %v833, %v881
  %v883 = vpop.f32.mrf.mxu0
  %v884 = vadd.f32 %v835, %v883
  %885 = vmatmul.bf16.gmra.mxu0 %v401
  %v886 = vpop.f32.mrf.mxu0
  %v887 = vadd.f32 %v838, %v886
  %v888 = vpop.f32.mrf.mxu0
  %v889 = vadd.f32 %v840, %v888
  %890 = vmatmul.bf16.gmra.mxu0 %v405
  %v891 = vpop.f32.mrf.mxu0
  %v892 = vadd.f32 %v843, %v891
  %v893 = vpop.f32.mrf.mxu0
  %v894 = vadd.f32 %v845, %v893
  %895 = vdwg.mxu0
  %896 = vmatpush.bf16.msra.mxu0 %v716
  %897 = vmatpush.bf16.msra.mxu0 %v714
  %898 = vmatpush.bf16.msra.mxu0 %v712
  %899 = vmatpush.bf16.msra.mxu0 %v710
  %900 = vmatpush.bf16.msra.mxu0 %v708
  %901 = vmatpush.bf16.msra.mxu0 %v706
  %902 = vmatpush.bf16.msra.mxu0 %v704
  %903 = vmatpush.bf16.msra.mxu0 %v702
  %904 = vmatmul.bf16.gmra.mxu0 %v378
  %v905 = vpop.f32.mrf.mxu0
  %v906 = vadd.f32 %v857, %v905
  %v907 = vpop.f32.mrf.mxu0
  %v908 = vadd.f32 %v859, %v907
  %909 = vmatmul.bf16.gmra.mxu0 %v382
  %v910 = vpop.f32.mrf.mxu0
  %v911 = vadd.f32 %v862, %v910
  %v912 = vpop.f32.mrf.mxu0
  %v913 = vadd.f32 %v864, %v912
  %914 = vmatmul.bf16.gmra.mxu0 %v386
  %v915 = vpop.f32.mrf.mxu0
  %v916 = vadd.f32 %v867, %v915
  %v917 = vpop.f32.mrf.mxu0
  %v918 = vadd.f32 %v869, %v917
  %919 = vmatmul.bf16.gmra.mxu0 %v390
  %v920 = vpop.f32.mrf.mxu0
  %v921 = vadd.f32 %v872, %v920
  %v922 = vpop.f32.mrf.mxu0
  %v923 = vadd.f32 %v874, %v922
  %924 = vmatmul.bf16.gmra.mxu0 %v394
  %v925 = vpop.f32.mrf.mxu0
  %v926 = vadd.f32 %v877, %v925
  %v927 = vpop.f32.mrf.mxu0
  %v928 = vadd.f32 %v879, %v927
  %929 = vmatmul.bf16.gmra.mxu0 %v398
  %v930 = vpop.f32.mrf.mxu0
  %v931 = vadd.f32 %v882, %v930
  %v932 = vpop.f32.mrf.mxu0
  %v933 = vadd.f32 %v884, %v932
  %934 = vmatmul.bf16.gmra.mxu0 %v402
  %v935 = vpop.f32.mrf.mxu0
  %v936 = vadd.f32 %v887, %v935
  %v937 = vpop.f32.mrf.mxu0
  %v938 = vadd.f32 %v889, %v937
  %939 = vmatmul.bf16.gmra.mxu0 %v406
  %v940 = vpop.f32.mrf.mxu0
  %v941 = vadd.f32 %v892, %v940
  %v942 = vpop.f32.mrf.mxu0
  %v943 = vadd.f32 %v894, %v942
  %944 = vdwg.mxu0
  %945 = vmatpush.bf16.msra.mxu0 %v732
  %946 = vmatpush.bf16.msra.mxu0 %v730
  %947 = vmatpush.bf16.msra.mxu0 %v728
  %948 = vmatpush.bf16.msra.mxu0 %v726
  %949 = vmatpush.bf16.msra.mxu0 %v724
  %950 = vmatpush.bf16.msra.mxu0 %v722
  %951 = vmatpush.bf16.msra.mxu0 %v720
  %952 = vmatpush.bf16.msra.mxu0 %v718
  %953 = vmatmul.bf16.gmra.mxu0 %v379
  %v954 = vpop.f32.mrf.mxu0
  %v955 = vadd.f32 %v906, %v954
  %v956 = vpop.f32.mrf.mxu0
  %v957 = vadd.f32 %v908, %v956
  %958 = vmatmul.bf16.gmra.mxu0 %v383
  %v959 = vpop.f32.mrf.mxu0
  %v960 = vadd.f32 %v911, %v959
  %v961 = vpop.f32.mrf.mxu0
  %v962 = vadd.f32 %v913, %v961
  %963 = vmatmul.bf16.gmra.mxu0 %v387
  %v964 = vpop.f32.mrf.mxu0
  %v965 = vadd.f32 %v916, %v964
  %v966 = vpop.f32.mrf.mxu0
  %v967 = vadd.f32 %v918, %v966
  %968 = vmatmul.bf16.gmra.mxu0 %v391
  %v969 = vpop.f32.mrf.mxu0
  %v970 = vadd.f32 %v921, %v969
  %v971 = vpop.f32.mrf.mxu0
  %v972 = vadd.f32 %v923, %v971
  %973 = vmatmul.bf16.gmra.mxu0 %v395
  %v974 = vpop.f32.mrf.mxu0
  %v975 = vadd.f32 %v926, %v974
  %v976 = vpop.f32.mrf.mxu0
  %v977 = vadd.f32 %v928, %v976
  %978 = vmatmul.bf16.gmra.mxu0 %v399
  %v979 = vpop.f32.mrf.mxu0
  %v980 = vadd.f32 %v931, %v979
  %v981 = vpop.f32.mrf.mxu0
  %v982 = vadd.f32 %v933, %v981
  %983 = vmatmul.bf16.gmra.mxu0 %v403
  %v984 = vpop.f32.mrf.mxu0
  %v985 = vadd.f32 %v936, %v984
  %v986 = vpop.f32.mrf.mxu0
  %v987 = vadd.f32 %v938, %v986
  %988 = vmatmul.bf16.gmra.mxu0 %v407
  %v989 = vpop.f32.mrf.mxu0
  %v990 = vadd.f32 %v941, %v989
  %v991 = vpop.f32.mrf.mxu0
  %v992 = vadd.f32 %v943, %v991
  %993 = vdwg.mxu0
  %994 = vmatpush.bf16.msra.mxu0 %v685
  %995 = vmatpush.bf16.msra.mxu0 %v683
  %996 = vmatpush.bf16.msra.mxu0 %v681
  %997 = vmatpush.bf16.msra.mxu0 %v679
  %998 = vmatpush.bf16.msra.mxu0 %v677
  %999 = vmatpush.bf16.msra.mxu0 %v675
  %1000 = vmatpush.bf16.msra.mxu0 %v673
  %1001 = vmatpush.bf16.msra.mxu0 %v671
  %1002 = vmatmul.bf16.gmra.mxu0 %v376
  %v1003 = vpop.f32.mrf.mxu0
  %v1004 = vadd.f32 %v475, %v1003
  %v1005 = vpop.f32.mrf.mxu0
  %v1006 = vadd.f32 %v475, %v1005
  %1007 = vmatmul.bf16.gmra.mxu0 %v380
  %v1008 = vpop.f32.mrf.mxu0
  %v1009 = vadd.f32 %v475, %v1008
  %v1010 = vpop.f32.mrf.mxu0
  %v1011 = vadd.f32 %v475, %v1010
  %1012 = vmatmul.bf16.gmra.mxu0 %v384
  %v1013 = vpop.f32.mrf.mxu0
  %v1014 = vadd.f32 %v475, %v1013
  %v1015 = vpop.f32.mrf.mxu0
  %v1016 = vadd.f32 %v475, %v1015
  %1017 = vmatmul.bf16.gmra.mxu0 %v388
  %v1018 = vpop.f32.mrf.mxu0
  %v1019 = vadd.f32 %v475, %v1018
  %v1020 = vpop.f32.mrf.mxu0
  %v1021 = vadd.f32 %v475, %v1020
  %1022 = vmatmul.bf16.gmra.mxu0 %v392
  %v1023 = vpop.f32.mrf.mxu0
  %v1024 = vadd.f32 %v475, %v1023
  %v1025 = vpop.f32.mrf.mxu0
  %v1026 = vadd.f32 %v475, %v1025
  %1027 = vmatmul.bf16.gmra.mxu0 %v396
  %v1028 = vpop.f32.mrf.mxu0
  %v1029 = vadd.f32 %v475, %v1028
  %v1030 = vpop.f32.mrf.mxu0
  %v1031 = vadd.f32 %v475, %v1030
  %1032 = vmatmul.bf16.gmra.mxu0 %v400
  %v1033 = vpop.f32.mrf.mxu0
  %v1034 = vadd.f32 %v475, %v1033
  %v1035 = vpop.f32.mrf.mxu0
  %v1036 = vadd.f32 %v475, %v1035
  %1037 = vmatmul.bf16.gmra.mxu0 %v404
  %v1038 = vpop.f32.mrf.mxu0
  %v1039 = vadd.f32 %v475, %v1038
  %v1040 = vpop.f32.mrf.mxu0
  %v1041 = vadd.f32 %v475, %v1040
  %1042 = vdwg.mxu0
  %1043 = vmatpush.bf16.msra.mxu0 %v701
  %1044 = vmatpush.bf16.msra.mxu0 %v699
  %1045 = vmatpush.bf16.msra.mxu0 %v697
  %1046 = vmatpush.bf16.msra.mxu0 %v695
  %1047 = vmatpush.bf16.msra.mxu0 %v693
  %1048 = vmatpush.bf16.msra.mxu0 %v691
  %1049 = vmatpush.bf16.msra.mxu0 %v689
  %1050 = vmatpush.bf16.msra.mxu0 %v687
  %1051 = vmatmul.bf16.gmra.mxu0 %v377
  %v1052 = vpop.f32.mrf.mxu0
  %v1053 = vadd.f32 %v1004, %v1052
  %v1054 = vpop.f32.mrf.mxu0
  %v1055 = vadd.f32 %v1006, %v1054
  %1056 = vmatmul.bf16.gmra.mxu0 %v381
  %v1057 = vpop.f32.mrf.mxu0
  %v1058 = vadd.f32 %v1009, %v1057
  %v1059 = vpop.f32.mrf.mxu0
  %v1060 = vadd.f32 %v1011, %v1059
  %1061 = vmatmul.bf16.gmra.mxu0 %v385
  %v1062 = vpop.f32.mrf.mxu0
  %v1063 = vadd.f32 %v1014, %v1062
  %v1064 = vpop.f32.mrf.mxu0
  %v1065 = vadd.f32 %v1016, %v1064
  %1066 = vmatmul.bf16.gmra.mxu0 %v389
  %v1067 = vpop.f32.mrf.mxu0
  %v1068 = vadd.f32 %v1019, %v1067
  %v1069 = vpop.f32.mrf.mxu0
  %v1070 = vadd.f32 %v1021, %v1069
  %1071 = vmatmul.bf16.gmra.mxu0 %v393
  %v1072 = vpop.f32.mrf.mxu0
  %v1073 = vadd.f32 %v1024, %v1072
  %v1074 = vpop.f32.mrf.mxu0
  %v1075 = vadd.f32 %v1026, %v1074
  %1076 = vmatmul.bf16.gmra.mxu0 %v397
  %v1077 = vpop.f32.mrf.mxu0
  %v1078 = vadd.f32 %v1029, %v1077
  %v1079 = vpop.f32.mrf.mxu0
  %v1080 = vadd.f32 %v1031, %v1079
  %1081 = vmatmul.bf16.gmra.mxu0 %v401
  %v1082 = vpop.f32.mrf.mxu0
  %v1083 = vadd.f32 %v1034, %v1082
  %v1084 = vpop.f32.mrf.mxu0
  %v1085 = vadd.f32 %v1036, %v1084
  %1086 = vmatmul.bf16.gmra.mxu0 %v405
  %v1087 = vpop.f32.mrf.mxu0
  %v1088 = vadd.f32 %v1039, %v1087
  %v1089 = vpop.f32.mrf.mxu0
  %v1090 = vadd.f32 %v1041, %v1089
  %1091 = vdwg.mxu0
  %1092 = vmatpush.bf16.msra.mxu0 %v717
  %1093 = vmatpush.bf16.msra.mxu0 %v715
  %1094 = vmatpush.bf16.msra.mxu0 %v713
  %1095 = vmatpush.bf16.msra.mxu0 %v711
  %1096 = vmatpush.bf16.msra.mxu0 %v709
  %1097 = vmatpush.bf16.msra.mxu0 %v707
  %1098 = vmatpush.bf16.msra.mxu0 %v705
  %1099 = vmatpush.bf16.msra.mxu0 %v703
  %1100 = vmatmul.bf16.gmra.mxu0 %v378
  %v1101 = vpop.f32.mrf.mxu0
  %v1102 = vadd.f32 %v1053, %v1101
  %v1103 = vpop.f32.mrf.mxu0
  %v1104 = vadd.f32 %v1055, %v1103
  %1105 = vmatmul.bf16.gmra.mxu0 %v382
  %v1106 = vpop.f32.mrf.mxu0
  %v1107 = vadd.f32 %v1058, %v1106
  %v1108 = vpop.f32.mrf.mxu0
  %v1109 = vadd.f32 %v1060, %v1108
  %1110 = vmatmul.bf16.gmra.mxu0 %v386
  %v1111 = vpop.f32.mrf.mxu0
  %v1112 = vadd.f32 %v1063, %v1111
  %v1113 = vpop.f32.mrf.mxu0
  %v1114 = vadd.f32 %v1065, %v1113
  %1115 = vmatmul.bf16.gmra.mxu0 %v390
  %v1116 = vpop.f32.mrf.mxu0
  %v1117 = vadd.f32 %v1068, %v1116
  %v1118 = vpop.f32.mrf.mxu0
  %v1119 = vadd.f32 %v1070, %v1118
  %1120 = vmatmul.bf16.gmra.mxu0 %v394
  %v1121 = vpop.f32.mrf.mxu0
  %v1122 = vadd.f32 %v1073, %v1121
  %v1123 = vpop.f32.mrf.mxu0
  %v1124 = vadd.f32 %v1075, %v1123
  %1125 = vmatmul.bf16.gmra.mxu0 %v398
  %v1126 = vpop.f32.mrf.mxu0
  %v1127 = vadd.f32 %v1078, %v1126
  %v1128 = vpop.f32.mrf.mxu0
  %v1129 = vadd.f32 %v1080, %v1128
  %1130 = vmatmul.bf16.gmra.mxu0 %v402
  %v1131 = vpop.f32.mrf.mxu0
  %v1132 = vadd.f32 %v1083, %v1131
  %v1133 = vpop.f32.mrf.mxu0
  %v1134 = vadd.f32 %v1085, %v1133
  %1135 = vmatmul.bf16.gmra.mxu0 %v406
  %v1136 = vpop.f32.mrf.mxu0
  %v1137 = vadd.f32 %v1088, %v1136
  %v1138 = vpop.f32.mrf.mxu0
  %v1139 = vadd.f32 %v1090, %v1138
  %1140 = vdwg.mxu0
  %1141 = vmatpush.bf16.msra.mxu0 %v733
  %1142 = vmatpush.bf16.msra.mxu0 %v731
  %1143 = vmatpush.bf16.msra.mxu0 %v729
  %1144 = vmatpush.bf16.msra.mxu0 %v727
  %1145 = vmatpush.bf16.msra.mxu0 %v725
  %1146 = vmatpush.bf16.msra.mxu0 %v723
  %1147 = vmatpush.bf16.msra.mxu0 %v721
  %1148 = vmatpush.bf16.msra.mxu0 %v719
  %1149 = vmatmul.bf16.gmra.mxu0 %v379
  %v1150 = vpop.f32.mrf.mxu0
  %v1151 = vadd.f32 %v1102, %v1150
  %v1152 = vpop.f32.mrf.mxu0
  %v1153 = vadd.f32 %v1104, %v1152
  %1154 = vmatmul.bf16.gmra.mxu0 %v383
  %v1155 = vpop.f32.mrf.mxu0
  %v1156 = vadd.f32 %v1107, %v1155
  %v1157 = vpop.f32.mrf.mxu0
  %v1158 = vadd.f32 %v1109, %v1157
  %1159 = vmatmul.bf16.gmra.mxu0 %v387
  %v1160 = vpop.f32.mrf.mxu0
  %v1161 = vadd.f32 %v1112, %v1160
  %v1162 = vpop.f32.mrf.mxu0
  %v1163 = vadd.f32 %v1114, %v1162
  %1164 = vmatmul.bf16.gmra.mxu0 %v391
  %v1165 = vpop.f32.mrf.mxu0
  %v1166 = vadd.f32 %v1117, %v1165
  %v1167 = vpop.f32.mrf.mxu0
  %v1168 = vadd.f32 %v1119, %v1167
  %1169 = vmatmul.bf16.gmra.mxu0 %v395
  %v1170 = vpop.f32.mrf.mxu0
  %v1171 = vadd.f32 %v1122, %v1170
  %v1172 = vpop.f32.mrf.mxu0
  %v1173 = vadd.f32 %v1124, %v1172
  %1174 = vmatmul.bf16.gmra.mxu0 %v399
  %v1175 = vpop.f32.mrf.mxu0
  %v1176 = vadd.f32 %v1127, %v1175
  %v1177 = vpop.f32.mrf.mxu0
  %v1178 = vadd.f32 %v1129, %v1177
  %1179 = vmatmul.bf16.gmra.mxu0 %v403
  %v1180 = vpop.f32.mrf.mxu0
  %v1181 = vadd.f32 %v1132, %v1180
  %v1182 = vpop.f32.mrf.mxu0
  %v1183 = vadd.f32 %v1134, %v1182
  %1184 = vmatmul.bf16.gmra.mxu0 %v407
  %v1185 = vpop.f32.mrf.mxu0
  %v1186 = vadd.f32 %v1137, %v1185
  %v1187 = vpop.f32.mrf.mxu0
  %v1188 = vadd.f32 %v1139, %v1187
  %1189 = vdwg.mxu0
  %v1190 = vmax.f32 %v955, 0.0
  %v1191 = vmax.f32 %v1151, 0.0
  %v1192 = vmax.f32 %v957, 0.0
  %v1193 = vmax.f32 %v1153, 0.0
  %v1194 = vmax.f32 %v960, 0.0
  %v1195 = vmax.f32 %v1156, 0.0
  %v1196 = vmax.f32 %v962, 0.0
  %v1197 = vmax.f32 %v1158, 0.0
  %v1198 = vmax.f32 %v965, 0.0
  %v1199 = vmax.f32 %v1161, 0.0
  %v1200 = vmax.f32 %v967, 0.0
  %v1201 = vmax.f32 %v1163, 0.0
  %v1202 = vmax.f32 %v970, 0.0
  %v1203 = vmax.f32 %v1166, 0.0
  %v1204 = vmax.f32 %v972, 0.0
  %v1205 = vmax.f32 %v1168, 0.0
  %v1206 = vmax.f32 %v975, 0.0
  %v1207 = vmax.f32 %v1171, 0.0
  %v1208 = vmax.f32 %v977, 0.0
  %v1209 = vmax.f32 %v1173, 0.0
  %v1210 = vmax.f32 %v980, 0.0
  %v1211 = vmax.f32 %v1176, 0.0
  %v1212 = vmax.f32 %v982, 0.0
  %v1213 = vmax.f32 %v1178, 0.0
  %v1214 = vmax.f32 %v985, 0.0
  %v1215 = vmax.f32 %v1181, 0.0
  %v1216 = vmax.f32 %v987, 0.0
  %v1217 = vmax.f32 %v1183, 0.0
  %v1218 = vmax.f32 %v990, 0.0
  %v1219 = vmax.f32 %v1186, 0.0
  %v1220 = vmax.f32 %v992, 0.0
  %v1221 = vmax.f32 %v1188, 0.0
  %v1222 = vpack.c.bf16 %v1192, %v1190
  %v1223 = vpack.c.bf16 %v1193, %v1191
  %v1224 = vpack.c.bf16 %v1196, %v1194
  %v1225 = vpack.c.bf16 %v1197, %v1195
  %v1226 = vpack.c.bf16 %v1200, %v1198
  %v1227 = vpack.c.bf16 %v1201, %v1199
  %v1228 = vpack.c.bf16 %v1204, %v1202
  %v1229 = vpack.c.bf16 %v1205, %v1203
  %v1230 = vpack.c.bf16 %v1208, %v1206
  %v1231 = vpack.c.bf16 %v1209, %v1207
  %v1232 = vpack.c.bf16 %v1212, %v1210
  %v1233 = vpack.c.bf16 %v1213, %v1211
  %v1234 = vpack.c.bf16 %v1216, %v1214
  %v1235 = vpack.c.bf16 %v1217, %v1215
  %v1236 = vpack.c.bf16 %v1220, %v1218
  %v1237 = vpack.c.bf16 %v1221, %v1219
  %v1238 = vld [vmem:[%s5] sm:$0xf]
  %v1239 = vld [vmem:[%s5 + $0x4] sm:$0xf]
  %v1240 = vld [vmem:[%s5 + $0x8] sm:$0xf]
  %v1241 = vld [vmem:[%s5 + $0xc] sm:$0xf]
  %v1242 = vld [vmem:[%s5 + $0x10] sm:$0xf]
  %v1243 = vld [vmem:[%s5 + $0x14] sm:$0xf]
  %v1244 = vld [vmem:[%s5 + $0x18] sm:$0xf]
  %v1245 = vld [vmem:[%s5 + $0x1c] sm:$0xf]
  %v1246 = vld [vmem:[%s5 + $0x20] sm:$0xf]
  %v1247 = vld [vmem:[%s5 + $0x24] sm:$0xf]
  %v1248 = vld [vmem:[%s5 + $0x28] sm:$0xf]
  %v1249 = vld [vmem:[%s5 + $0x2c] sm:$0xf]
  %v1250 = vld [vmem:[%s5 + $0x30] sm:$0xf]
  %v1251 = vld [vmem:[%s5 + $0x34] sm:$0xf]
  %v1252 = vld [vmem:[%s5 + $0x38] sm:$0xf]
  %v1253 = vld [vmem:[%s5 + $0x3c] sm:$0xf]
  %v1254 = vld [vmem:[%s5 + $0x40] sm:$0xf]
  %v1255 = vld [vmem:[%s5 + $0x44] sm:$0xf]
  %v1256 = vld [vmem:[%s5 + $0x48] sm:$0xf]
  %v1257 = vld [vmem:[%s5 + $0x4c] sm:$0xf]
  %v1258 = vld [vmem:[%s5 + $0x50] sm:$0xf]
  %v1259 = vld [vmem:[%s5 + $0x54] sm:$0xf]
  %v1260 = vld [vmem:[%s5 + $0x58] sm:$0xf]
  %v1261 = vld [vmem:[%s5 + $0x5c] sm:$0xf]
  %v1262 = vld [vmem:[%s5 + $0x60] sm:$0xf]
  %v1263 = vld [vmem:[%s5 + $0x64] sm:$0xf]
  %v1264 = vld [vmem:[%s5 + $0x68] sm:$0xf]
  %v1265 = vld [vmem:[%s5 + $0x6c] sm:$0xf]
  %v1266 = vld [vmem:[%s5 + $0x70] sm:$0xf]
  %v1267 = vld [vmem:[%s5 + $0x74] sm:$0xf]
  %v1268 = vld [vmem:[%s5 + $0x78] sm:$0xf]
  %v1269 = vld [vmem:[%s5 + $0x7c] sm:$0xf]
  %v1270 = vld [vmem:[%s6] sm:$0x1]
  %v1272 = vperm.slane %v1270, 0
  %v1306 = vunpack.c.l.b16 %v1238
  %v1307 = vunpack.c.l.b16 %v1239
  %v1308 = vunpack.c.l.b16 %v1240
  %v1309 = vunpack.c.l.b16 %v1241
  %v1310 = vunpack.c.l.b16 %v1242
  %v1311 = vunpack.c.l.b16 %v1243
  %v1312 = vunpack.c.l.b16 %v1244
  %v1313 = vunpack.c.l.b16 %v1245
  %v1314 = vunpack.c.l.b16 %v1246
  %v1315 = vunpack.c.l.b16 %v1247
  %v1316 = vunpack.c.l.b16 %v1248
  %v1317 = vunpack.c.l.b16 %v1249
  %v1318 = vunpack.c.l.b16 %v1250
  %v1319 = vunpack.c.l.b16 %v1251
  %v1320 = vunpack.c.l.b16 %v1252
  %v1321 = vunpack.c.l.b16 %v1253
  %v1322 = vunpack.c.l.b16 %v1254
  %v1323 = vunpack.c.l.b16 %v1255
  %v1324 = vunpack.c.l.b16 %v1256
  %v1325 = vunpack.c.l.b16 %v1257
  %v1326 = vunpack.c.l.b16 %v1258
  %v1327 = vunpack.c.l.b16 %v1259
  %v1328 = vunpack.c.l.b16 %v1260
  %v1329 = vunpack.c.l.b16 %v1261
  %v1330 = vunpack.c.l.b16 %v1262
  %v1331 = vunpack.c.l.b16 %v1263
  %v1332 = vunpack.c.l.b16 %v1264
  %v1333 = vunpack.c.l.b16 %v1265
  %v1334 = vunpack.c.l.b16 %v1266
  %v1335 = vunpack.c.l.b16 %v1267
  %v1336 = vunpack.c.l.b16 %v1268
  %v1337 = vunpack.c.l.b16 %v1269
  %v1338 = vpack.c.b16 %v1307, %v1306
  %v1339 = vpack.c.b16 %v1309, %v1308
  %v1340 = vpack.c.b16 %v1311, %v1310
  %v1341 = vpack.c.b16 %v1313, %v1312
  %v1342 = vpack.c.b16 %v1315, %v1314
  %v1343 = vpack.c.b16 %v1317, %v1316
  %v1344 = vpack.c.b16 %v1319, %v1318
  %v1345 = vpack.c.b16 %v1321, %v1320
  %v1346 = vpack.c.b16 %v1323, %v1322
  %v1347 = vpack.c.b16 %v1325, %v1324
  %v1348 = vpack.c.b16 %v1327, %v1326
  %v1349 = vpack.c.b16 %v1329, %v1328
  %v1350 = vpack.c.b16 %v1331, %v1330
  %v1351 = vpack.c.b16 %v1333, %v1332
  %v1352 = vpack.c.b16 %v1335, %v1334
  %v1353 = vpack.c.b16 %v1337, %v1336
  %1370 = vmatpush.bf16.msra.mxu0 %v1345
  %1371 = vmatpush.bf16.msra.mxu0 %v1344
  %1372 = vmatpush.bf16.msra.mxu0 %v1343
  %1373 = vmatpush.bf16.msra.mxu0 %v1342
  %1374 = vmatpush.bf16.msra.mxu0 %v1341
  %1375 = vmatpush.bf16.msra.mxu0 %v1340
  %1376 = vmatpush.bf16.msra.mxu0 %v1339
  %1377 = vmatpush.bf16.msra.mxu0 %v1338
  %1378 = vmatmul.bf16.gmra.mxu0 %v1222
  %v1379 = vpop.f32.mrf.mxu0
  %v1380 = vadd.f32 %v1272, %v1379
  %v1381 = vpop.f32.mrf.mxu0
  %v1382 = vadd.f32 %v1272, %v1381
  %1383 = vmatmul.bf16.gmra.mxu0 %v1224
  %v1384 = vpop.f32.mrf.mxu0
  %v1385 = vadd.f32 %v1272, %v1384
  %v1386 = vpop.f32.mrf.mxu0
  %v1387 = vadd.f32 %v1272, %v1386
  %1388 = vmatmul.bf16.gmra.mxu0 %v1226
  %v1389 = vpop.f32.mrf.mxu0
  %v1390 = vadd.f32 %v1272, %v1389
  %v1391 = vpop.f32.mrf.mxu0
  %v1392 = vadd.f32 %v1272, %v1391
  %1393 = vmatmul.bf16.gmra.mxu0 %v1228
  %v1394 = vpop.f32.mrf.mxu0
  %v1395 = vadd.f32 %v1272, %v1394
  %v1396 = vpop.f32.mrf.mxu0
  %v1397 = vadd.f32 %v1272, %v1396
  %1398 = vmatmul.bf16.gmra.mxu0 %v1230
  %v1399 = vpop.f32.mrf.mxu0
  %v1400 = vadd.f32 %v1272, %v1399
  %v1401 = vpop.f32.mrf.mxu0
  %v1402 = vadd.f32 %v1272, %v1401
  %1403 = vmatmul.bf16.gmra.mxu0 %v1232
  %v1404 = vpop.f32.mrf.mxu0
  %v1405 = vadd.f32 %v1272, %v1404
  %v1406 = vpop.f32.mrf.mxu0
  %v1407 = vadd.f32 %v1272, %v1406
  %1408 = vmatmul.bf16.gmra.mxu0 %v1234
  %v1409 = vpop.f32.mrf.mxu0
  %v1410 = vadd.f32 %v1272, %v1409
  %v1411 = vpop.f32.mrf.mxu0
  %v1412 = vadd.f32 %v1272, %v1411
  %1413 = vmatmul.bf16.gmra.mxu0 %v1236
  %v1414 = vpop.f32.mrf.mxu0
  %v1415 = vadd.f32 %v1272, %v1414
  %v1416 = vpop.f32.mrf.mxu0
  %v1417 = vadd.f32 %v1272, %v1416
  %1418 = vdwg.mxu0
  %1419 = vmatpush.bf16.msra.mxu0 %v1353
  %1420 = vmatpush.bf16.msra.mxu0 %v1352
  %1421 = vmatpush.bf16.msra.mxu0 %v1351
  %1422 = vmatpush.bf16.msra.mxu0 %v1350
  %1423 = vmatpush.bf16.msra.mxu0 %v1349
  %1424 = vmatpush.bf16.msra.mxu0 %v1348
  %1425 = vmatpush.bf16.msra.mxu0 %v1347
  %1426 = vmatpush.bf16.msra.mxu0 %v1346
  %1427 = vmatmul.bf16.gmra.mxu0 %v1223
  %v1428 = vpop.f32.mrf.mxu0
  %v1429 = vadd.f32 %v1380, %v1428
  %v1430 = vpop.f32.mrf.mxu0
  %v1431 = vadd.f32 %v1382, %v1430
  %1432 = vmatmul.bf16.gmra.mxu0 %v1225
  %v1433 = vpop.f32.mrf.mxu0
  %v1434 = vadd.f32 %v1385, %v1433
  %v1435 = vpop.f32.mrf.mxu0
  %v1436 = vadd.f32 %v1387, %v1435
  %1437 = vmatmul.bf16.gmra.mxu0 %v1227
  %v1438 = vpop.f32.mrf.mxu0
  %v1439 = vadd.f32 %v1390, %v1438
  %v1440 = vpop.f32.mrf.mxu0
  %v1441 = vadd.f32 %v1392, %v1440
  %1442 = vmatmul.bf16.gmra.mxu0 %v1229
  %v1443 = vpop.f32.mrf.mxu0
  %v1444 = vadd.f32 %v1395, %v1443
  %v1445 = vpop.f32.mrf.mxu0
  %v1446 = vadd.f32 %v1397, %v1445
  %1447 = vmatmul.bf16.gmra.mxu0 %v1231
  %v1448 = vpop.f32.mrf.mxu0
  %v1449 = vadd.f32 %v1400, %v1448
  %v1450 = vpop.f32.mrf.mxu0
  %v1451 = vadd.f32 %v1402, %v1450
  %1452 = vmatmul.bf16.gmra.mxu0 %v1233
  %v1453 = vpop.f32.mrf.mxu0
  %v1454 = vadd.f32 %v1405, %v1453
  %v1455 = vpop.f32.mrf.mxu0
  %v1456 = vadd.f32 %v1407, %v1455
  %1457 = vmatmul.bf16.gmra.mxu0 %v1235
  %v1458 = vpop.f32.mrf.mxu0
  %v1459 = vadd.f32 %v1410, %v1458
  %v1460 = vpop.f32.mrf.mxu0
  %v1461 = vadd.f32 %v1412, %v1460
  %1462 = vmatmul.bf16.gmra.mxu0 %v1237
  %v1463 = vpop.f32.mrf.mxu0
  %v1464 = vadd.f32 %v1415, %v1463
  %v1465 = vpop.f32.mrf.mxu0
  %v1466 = vadd.f32 %v1417, %v1465
  %1467 = vdwg.mxu0
  %v1468 = vmax.f32 %v1429, 0.0
  %v1469 = vmax.f32 %v1431, 0.0
  %v1470 = vmax.f32 %v1434, 0.0
  %v1471 = vmax.f32 %v1436, 0.0
  %v1472 = vmax.f32 %v1439, 0.0
  %v1473 = vmax.f32 %v1441, 0.0
  %v1474 = vmax.f32 %v1444, 0.0
  %v1475 = vmax.f32 %v1446, 0.0
  %v1476 = vmax.f32 %v1449, 0.0
  %v1477 = vmax.f32 %v1451, 0.0
  %v1478 = vmax.f32 %v1454, 0.0
  %v1479 = vmax.f32 %v1456, 0.0
  %v1480 = vmax.f32 %v1459, 0.0
  %v1481 = vmax.f32 %v1461, 0.0
  %v1482 = vmax.f32 %v1464, 0.0
  %v1483 = vmax.f32 %v1466, 0.0
  %v1484 = vpack.c.bf16 %v1469, %v1468
  %v1485 = vpack.c.bf16 %v1471, %v1470
  %v1486 = vpack.c.bf16 %v1473, %v1472
  %v1487 = vpack.c.bf16 %v1475, %v1474
  %v1488 = vpack.c.bf16 %v1477, %v1476
  %v1489 = vpack.c.bf16 %v1479, %v1478
  %v1490 = vpack.c.bf16 %v1481, %v1480
  %v1491 = vpack.c.bf16 %v1483, %v1482
  %v1492 = vld [vmem:[%s7] sm:$0xf]
  %v1493 = vld [vmem:[%s7 + $0x4] sm:$0xf]
  %v1494 = vld [vmem:[%s7 + $0x8] sm:$0xf]
  %v1495 = vld [vmem:[%s7 + $0xc] sm:$0xf]
  %v1496 = vld [vmem:[%s7 + $0x10] sm:$0xf]
  %v1497 = vld [vmem:[%s7 + $0x14] sm:$0xf]
  %v1498 = vld [vmem:[%s7 + $0x18] sm:$0xf]
  %v1499 = vld [vmem:[%s7 + $0x1c] sm:$0xf]
  %v1500 = vld [vmem:[%s7 + $0x20] sm:$0xf]
  %v1501 = vld [vmem:[%s7 + $0x24] sm:$0xf]
  %v1502 = vld [vmem:[%s7 + $0x28] sm:$0xf]
  %v1503 = vld [vmem:[%s7 + $0x2c] sm:$0xf]
  %v1504 = vld [vmem:[%s7 + $0x30] sm:$0xf]
  %v1505 = vld [vmem:[%s7 + $0x34] sm:$0xf]
  %v1506 = vld [vmem:[%s7 + $0x38] sm:$0xf]
  %v1507 = vld [vmem:[%s7 + $0x3c] sm:$0xf]
  %v1508 = vld [vmem:[%s8] sm:$0x1]
  %v1510 = vperm.slane %v1508, 0
  %v1528 = vunpack.c.l.b16 %v1492
  %v1529 = vunpack.c.l.b16 %v1493
  %v1530 = vunpack.c.l.b16 %v1494
  %v1531 = vunpack.c.l.b16 %v1495
  %v1532 = vunpack.c.l.b16 %v1496
  %v1533 = vunpack.c.l.b16 %v1497
  %v1534 = vunpack.c.l.b16 %v1498
  %v1535 = vunpack.c.l.b16 %v1499
  %v1536 = vunpack.c.l.b16 %v1500
  %v1537 = vunpack.c.l.b16 %v1501
  %v1538 = vunpack.c.l.b16 %v1502
  %v1539 = vunpack.c.l.b16 %v1503
  %v1540 = vunpack.c.l.b16 %v1504
  %v1541 = vunpack.c.l.b16 %v1505
  %v1542 = vunpack.c.l.b16 %v1506
  %v1543 = vunpack.c.l.b16 %v1507
  %v1544 = vpack.c.b16 %v1529, %v1528
  %v1545 = vpack.c.b16 %v1531, %v1530
  %v1546 = vpack.c.b16 %v1533, %v1532
  %v1547 = vpack.c.b16 %v1535, %v1534
  %v1548 = vpack.c.b16 %v1537, %v1536
  %v1549 = vpack.c.b16 %v1539, %v1538
  %v1550 = vpack.c.b16 %v1541, %v1540
  %v1551 = vpack.c.b16 %v1543, %v1542
  %1560 = vmatpush.bf16.msra.mxu0 %v1551
  %1561 = vmatpush.bf16.msra.mxu0 %v1550
  %1562 = vmatpush.bf16.msra.mxu0 %v1549
  %1563 = vmatpush.bf16.msra.mxu0 %v1548
  %1564 = vmatpush.bf16.msra.mxu0 %v1547
  %1565 = vmatpush.bf16.msra.mxu0 %v1546
  %1566 = vmatpush.bf16.msra.mxu0 %v1545
  %1567 = vmatpush.bf16.msra.mxu0 %v1544
  %1568 = vmatmul.bf16.gmra.mxu0 %v1484
  %v1569 = vpop.f32.mrf.mxu0
  %v1570 = vadd.f32 %v1510, %v1569
  %v1571 = vpop.f32.mrf.mxu0
  %v1572 = vadd.f32 %v1510, %v1571
  %1573 = vmatmul.bf16.gmra.mxu0 %v1485
  %v1574 = vpop.f32.mrf.mxu0
  %v1575 = vadd.f32 %v1510, %v1574
  %v1576 = vpop.f32.mrf.mxu0
  %v1577 = vadd.f32 %v1510, %v1576
  %1578 = vmatmul.bf16.gmra.mxu0 %v1486
  %v1579 = vpop.f32.mrf.mxu0
  %v1580 = vadd.f32 %v1510, %v1579
  %v1581 = vpop.f32.mrf.mxu0
  %v1582 = vadd.f32 %v1510, %v1581
  %1583 = vmatmul.bf16.gmra.mxu0 %v1487
  %v1584 = vpop.f32.mrf.mxu0
  %v1585 = vadd.f32 %v1510, %v1584
  %v1586 = vpop.f32.mrf.mxu0
  %v1587 = vadd.f32 %v1510, %v1586
  %1588 = vmatmul.bf16.gmra.mxu0 %v1488
  %v1589 = vpop.f32.mrf.mxu0
  %v1590 = vadd.f32 %v1510, %v1589
  %v1591 = vpop.f32.mrf.mxu0
  %v1592 = vadd.f32 %v1510, %v1591
  %1593 = vmatmul.bf16.gmra.mxu0 %v1489
  %v1594 = vpop.f32.mrf.mxu0
  %v1595 = vadd.f32 %v1510, %v1594
  %v1596 = vpop.f32.mrf.mxu0
  %v1597 = vadd.f32 %v1510, %v1596
  %1598 = vmatmul.bf16.gmra.mxu0 %v1490
  %v1599 = vpop.f32.mrf.mxu0
  %v1600 = vadd.f32 %v1510, %v1599
  %v1601 = vpop.f32.mrf.mxu0
  %v1602 = vadd.f32 %v1510, %v1601
  %1603 = vmatmul.bf16.gmra.mxu0 %v1491
  %v1604 = vpop.f32.mrf.mxu0
  %v1605 = vadd.f32 %v1510, %v1604
  %v1606 = vpop.f32.mrf.mxu0
  %v1607 = vadd.f32 %v1510, %v1606
  %1608 = vdwg.mxu0
  %vm1609 = vcmask 64512
  %v1610 = vsel %vm1609, %v1570, -inf
  %1611 = vmax.xlane.f32.xlu0 %v1610
  %v1612 = vpop.xlane.xlu0 %1611
  %v1613 = vsel %vm1609, %v1572, -inf
  %1614 = vmax.xlane.f32.xlu0 %v1613
  %v1615 = vpop.xlane.xlu0 %1614
  %v1616 = vsel %vm1609, %v1575, -inf
  %1617 = vmax.xlane.f32.xlu0 %v1616
  %v1618 = vpop.xlane.xlu0 %1617
  %v1619 = vsel %vm1609, %v1577, -inf
  %1620 = vmax.xlane.f32.xlu0 %v1619
  %v1621 = vpop.xlane.xlu0 %1620
  %v1622 = vsel %vm1609, %v1580, -inf
  %1623 = vmax.xlane.f32.xlu0 %v1622
  %v1624 = vpop.xlane.xlu0 %1623
  %v1625 = vsel %vm1609, %v1582, -inf
  %1626 = vmax.xlane.f32.xlu0 %v1625
  %v1627 = vpop.xlane.xlu0 %1626
  %v1628 = vsel %vm1609, %v1585, -inf
  %1629 = vmax.xlane.f32.xlu0 %v1628
  %v1630 = vpop.xlane.xlu0 %1629
  %v1631 = vsel %vm1609, %v1587, -inf
  %1632 = vmax.xlane.f32.xlu0 %v1631
  %v1633 = vpop.xlane.xlu0 %1632
  %v1634 = vsel %vm1609, %v1590, -inf
  %1635 = vmax.xlane.f32.xlu0 %v1634
  %v1636 = vpop.xlane.xlu0 %1635
  %v1637 = vsel %vm1609, %v1592, -inf
  %1638 = vmax.xlane.f32.xlu0 %v1637
  %v1639 = vpop.xlane.xlu0 %1638
  %v1640 = vsel %vm1609, %v1595, -inf
  %1641 = vmax.xlane.f32.xlu0 %v1640
  %v1642 = vpop.xlane.xlu0 %1641
  %v1643 = vsel %vm1609, %v1597, -inf
  %1644 = vmax.xlane.f32.xlu0 %v1643
  %v1645 = vpop.xlane.xlu0 %1644
  %v1646 = vsel %vm1609, %v1600, -inf
  %1647 = vmax.xlane.f32.xlu0 %v1646
  %v1648 = vpop.xlane.xlu0 %1647
  %v1649 = vsel %vm1609, %v1602, -inf
  %1650 = vmax.xlane.f32.xlu0 %v1649
  %v1651 = vpop.xlane.xlu0 %1650
  %v1652 = vsel %vm1609, %v1605, -inf
  %1653 = vmax.xlane.f32.xlu0 %v1652
  %v1654 = vpop.xlane.xlu0 %1653
  %v1655 = vsel %vm1609, %v1607, -inf
  %1656 = vmax.xlane.f32.xlu0 %v1655
  %v1657 = vpop.xlane.xlu0 %1656
  %v1658 = vsub.f32 %v1570, %v1612
  %v1659 = vsub.f32 %v1572, %v1615
  %v1660 = vsub.f32 %v1575, %v1618
  %v1661 = vsub.f32 %v1577, %v1621
  %v1662 = vsub.f32 %v1580, %v1624
  %v1663 = vsub.f32 %v1582, %v1627
  %v1664 = vsub.f32 %v1585, %v1630
  %v1665 = vsub.f32 %v1587, %v1633
  %v1666 = vsub.f32 %v1590, %v1636
  %v1667 = vsub.f32 %v1592, %v1639
  %v1668 = vsub.f32 %v1595, %v1642
  %v1669 = vsub.f32 %v1597, %v1645
  %v1670 = vsub.f32 %v1600, %v1648
  %v1671 = vsub.f32 %v1602, %v1651
  %v1672 = vsub.f32 %v1605, %v1654
  %v1673 = vsub.f32 %v1607, %v1657
  %v1674 = vmul.f32 %v1658, 1.442695
  %v1675 = vpow.pop %v1674
  %v1676 = vmul.f32 %v1659, 1.442695
  %v1677 = vpow.pop %v1676
  %v1678 = vmul.f32 %v1660, 1.442695
  %v1679 = vpow.pop %v1678
  %v1680 = vmul.f32 %v1661, 1.442695
  %v1681 = vpow.pop %v1680
  %v1682 = vmul.f32 %v1662, 1.442695
  %v1683 = vpow.pop %v1682
  %v1684 = vmul.f32 %v1663, 1.442695
  %v1685 = vpow.pop %v1684
  %v1686 = vmul.f32 %v1664, 1.442695
  %v1687 = vpow.pop %v1686
  %v1688 = vmul.f32 %v1665, 1.442695
  %v1689 = vpow.pop %v1688
  %v1690 = vmul.f32 %v1666, 1.442695
  %v1691 = vpow.pop %v1690
  %v1692 = vmul.f32 %v1667, 1.442695
  %v1693 = vpow.pop %v1692
  %v1694 = vmul.f32 %v1668, 1.442695
  %v1695 = vpow.pop %v1694
  %v1696 = vmul.f32 %v1669, 1.442695
  %v1697 = vpow.pop %v1696
  %v1698 = vmul.f32 %v1670, 1.442695
  %v1699 = vpow.pop %v1698
  %v1700 = vmul.f32 %v1671, 1.442695
  %v1701 = vpow.pop %v1700
  %v1702 = vmul.f32 %v1672, 1.442695
  %v1703 = vpow.pop %v1702
  %v1704 = vmul.f32 %v1673, 1.442695
  %v1705 = vpow.pop %v1704
  %v1706 = vsel %vm1609, %v1675, 0.0
  %1707 = vadd.xlane.f32.xlu0 %v1706
  %v1708 = vpop.xlane.xlu0 %1707
  %v1709 = vsel %vm1609, %v1677, 0.0
  %1710 = vadd.xlane.f32.xlu0 %v1709
  %v1711 = vpop.xlane.xlu0 %1710
  %v1712 = vsel %vm1609, %v1679, 0.0
  %1713 = vadd.xlane.f32.xlu0 %v1712
  %v1714 = vpop.xlane.xlu0 %1713
  %v1715 = vsel %vm1609, %v1681, 0.0
  %1716 = vadd.xlane.f32.xlu0 %v1715
  %v1717 = vpop.xlane.xlu0 %1716
  %v1718 = vsel %vm1609, %v1683, 0.0
  %1719 = vadd.xlane.f32.xlu0 %v1718
  %v1720 = vpop.xlane.xlu0 %1719
  %v1721 = vsel %vm1609, %v1685, 0.0
  %1722 = vadd.xlane.f32.xlu0 %v1721
  %v1723 = vpop.xlane.xlu0 %1722
  %v1724 = vsel %vm1609, %v1687, 0.0
  %1725 = vadd.xlane.f32.xlu0 %v1724
  %v1726 = vpop.xlane.xlu0 %1725
  %v1727 = vsel %vm1609, %v1689, 0.0
  %1728 = vadd.xlane.f32.xlu0 %v1727
  %v1729 = vpop.xlane.xlu0 %1728
  %v1730 = vsel %vm1609, %v1691, 0.0
  %1731 = vadd.xlane.f32.xlu0 %v1730
  %v1732 = vpop.xlane.xlu0 %1731
  %v1733 = vsel %vm1609, %v1693, 0.0
  %1734 = vadd.xlane.f32.xlu0 %v1733
  %v1735 = vpop.xlane.xlu0 %1734
  %v1736 = vsel %vm1609, %v1695, 0.0
  %1737 = vadd.xlane.f32.xlu0 %v1736
  %v1738 = vpop.xlane.xlu0 %1737
  %v1739 = vsel %vm1609, %v1697, 0.0
  %1740 = vadd.xlane.f32.xlu0 %v1739
  %v1741 = vpop.xlane.xlu0 %1740
  %v1742 = vsel %vm1609, %v1699, 0.0
  %1743 = vadd.xlane.f32.xlu0 %v1742
  %v1744 = vpop.xlane.xlu0 %1743
  %v1745 = vsel %vm1609, %v1701, 0.0
  %1746 = vadd.xlane.f32.xlu0 %v1745
  %v1747 = vpop.xlane.xlu0 %1746
  %v1748 = vsel %vm1609, %v1703, 0.0
  %1749 = vadd.xlane.f32.xlu0 %v1748
  %v1750 = vpop.xlane.xlu0 %1749
  %v1751 = vsel %vm1609, %v1705, 0.0
  %1752 = vadd.xlane.f32.xlu0 %v1751
  %v1753 = vpop.xlane.xlu0 %1752
  %v1754 = vrcp.pop %v1708
  %v1755 = vmul.f32 %v1708, %v1754
  %v1756 = vsub.f32 1.0, %v1755
  %v1757 = vmul.f32 %v1754, %v1756
  %v1758 = vadd.f32 %v1754, %v1757
  %vm1759 = vweird.f32 %v1708
  %vm1760 = vweird.f32 %v1754
  %vm1761 = vmor %vm1759, %vm1760
  %v1762 = vsel %vm1761, %v1754, %v1758
  %v1763 = vand.u32 2147483647, %v1708
  %vm1764 = vcmp.eq.f32.partialorder %v1763, 8.507059e+37
  %v1765 = vand.u32 %v1708, 2147483648
  %v1766 = vor.u32 1.1754944e-38, %v1765
  %v1767 = vsel %vm1764, %v1766, %v1762
  %v1768 = vmul.f32 %v1675, %v1767
  %v1769 = vrcp.pop %v1711
  %v1770 = vmul.f32 %v1711, %v1769
  %v1771 = vsub.f32 1.0, %v1770
  %v1772 = vmul.f32 %v1769, %v1771
  %v1773 = vadd.f32 %v1769, %v1772
  %vm1774 = vweird.f32 %v1711
  %vm1775 = vweird.f32 %v1769
  %vm1776 = vmor %vm1774, %vm1775
  %v1777 = vsel %vm1776, %v1769, %v1773
  %v1778 = vand.u32 2147483647, %v1711
  %vm1779 = vcmp.eq.f32.partialorder %v1778, 8.507059e+37
  %v1780 = vand.u32 %v1711, 2147483648
  %v1781 = vor.u32 1.1754944e-38, %v1780
  %v1782 = vsel %vm1779, %v1781, %v1777
  %v1783 = vmul.f32 %v1677, %v1782
  %v1784 = vrcp.pop %v1714
  %v1785 = vmul.f32 %v1714, %v1784
  %v1786 = vsub.f32 1.0, %v1785
  %v1787 = vmul.f32 %v1784, %v1786
  %v1788 = vadd.f32 %v1784, %v1787
  %vm1789 = vweird.f32 %v1714
  %vm1790 = vweird.f32 %v1784
  %vm1791 = vmor %vm1789, %vm1790
  %v1792 = vsel %vm1791, %v1784, %v1788
  %v1793 = vand.u32 2147483647, %v1714
  %vm1794 = vcmp.eq.f32.partialorder %v1793, 8.507059e+37
  %v1795 = vand.u32 %v1714, 2147483648
  %v1796 = vor.u32 1.1754944e-38, %v1795
  %v1797 = vsel %vm1794, %v1796, %v1792
  %v1798 = vmul.f32 %v1679, %v1797
  %v1799 = vrcp.pop %v1717
  %v1800 = vmul.f32 %v1717, %v1799
  %v1801 = vsub.f32 1.0, %v1800
  %v1802 = vmul.f32 %v1799, %v1801
  %v1803 = vadd.f32 %v1799, %v1802
  %vm1804 = vweird.f32 %v1717
  %vm1805 = vweird.f32 %v1799
  %vm1806 = vmor %vm1804, %vm1805
  %v1807 = vsel %vm1806, %v1799, %v1803
  %v1808 = vand.u32 2147483647, %v1717
  %vm1809 = vcmp.eq.f32.partialorder %v1808, 8.507059e+37
  %v1810 = vand.u32 %v1717, 2147483648
  %v1811 = vor.u32 1.1754944e-38, %v1810
  %v1812 = vsel %vm1809, %v1811, %v1807
  %v1813 = vmul.f32 %v1681, %v1812
  %v1814 = vrcp.pop %v1720
  %v1815 = vmul.f32 %v1720, %v1814
  %v1816 = vsub.f32 1.0, %v1815
  %v1817 = vmul.f32 %v1814, %v1816
  %v1818 = vadd.f32 %v1814, %v1817
  %vm1819 = vweird.f32 %v1720
  %vm1820 = vweird.f32 %v1814
  %vm1821 = vmor %vm1819, %vm1820
  %v1822 = vsel %vm1821, %v1814, %v1818
  %v1823 = vand.u32 2147483647, %v1720
  %vm1824 = vcmp.eq.f32.partialorder %v1823, 8.507059e+37
  %v1825 = vand.u32 %v1720, 2147483648
  %v1826 = vor.u32 1.1754944e-38, %v1825
  %v1827 = vsel %vm1824, %v1826, %v1822
  %v1828 = vmul.f32 %v1683, %v1827
  %v1829 = vrcp.pop %v1723
  %v1830 = vmul.f32 %v1723, %v1829
  %v1831 = vsub.f32 1.0, %v1830
  %v1832 = vmul.f32 %v1829, %v1831
  %v1833 = vadd.f32 %v1829, %v1832
  %vm1834 = vweird.f32 %v1723
  %vm1835 = vweird.f32 %v1829
  %vm1836 = vmor %vm1834, %vm1835
  %v1837 = vsel %vm1836, %v1829, %v1833
  %v1838 = vand.u32 2147483647, %v1723
  %vm1839 = vcmp.eq.f32.partialorder %v1838, 8.507059e+37
  %v1840 = vand.u32 %v1723, 2147483648
  %v1841 = vor.u32 1.1754944e-38, %v1840
  %v1842 = vsel %vm1839, %v1841, %v1837
  %v1843 = vmul.f32 %v1685, %v1842
  %v1844 = vrcp.pop %v1726
  %v1845 = vmul.f32 %v1726, %v1844
  %v1846 = vsub.f32 1.0, %v1845
  %v1847 = vmul.f32 %v1844, %v1846
  %v1848 = vadd.f32 %v1844, %v1847
  %vm1849 = vweird.f32 %v1726
  %vm1850 = vweird.f32 %v1844
  %vm1851 = vmor %vm1849, %vm1850
  %v1852 = vsel %vm1851, %v1844, %v1848
  %v1853 = vand.u32 2147483647, %v1726
  %vm1854 = vcmp.eq.f32.partialorder %v1853, 8.507059e+37
  %v1855 = vand.u32 %v1726, 2147483648
  %v1856 = vor.u32 1.1754944e-38, %v1855
  %v1857 = vsel %vm1854, %v1856, %v1852
  %v1858 = vmul.f32 %v1687, %v1857
  %v1859 = vrcp.pop %v1729
  %v1860 = vmul.f32 %v1729, %v1859
  %v1861 = vsub.f32 1.0, %v1860
  %v1862 = vmul.f32 %v1859, %v1861
  %v1863 = vadd.f32 %v1859, %v1862
  %vm1864 = vweird.f32 %v1729
  %vm1865 = vweird.f32 %v1859
  %vm1866 = vmor %vm1864, %vm1865
  %v1867 = vsel %vm1866, %v1859, %v1863
  %v1868 = vand.u32 2147483647, %v1729
  %vm1869 = vcmp.eq.f32.partialorder %v1868, 8.507059e+37
  %v1870 = vand.u32 %v1729, 2147483648
  %v1871 = vor.u32 1.1754944e-38, %v1870
  %v1872 = vsel %vm1869, %v1871, %v1867
  %v1873 = vmul.f32 %v1689, %v1872
  %v1874 = vrcp.pop %v1732
  %v1875 = vmul.f32 %v1732, %v1874
  %v1876 = vsub.f32 1.0, %v1875
  %v1877 = vmul.f32 %v1874, %v1876
  %v1878 = vadd.f32 %v1874, %v1877
  %vm1879 = vweird.f32 %v1732
  %vm1880 = vweird.f32 %v1874
  %vm1881 = vmor %vm1879, %vm1880
  %v1882 = vsel %vm1881, %v1874, %v1878
  %v1883 = vand.u32 2147483647, %v1732
  %vm1884 = vcmp.eq.f32.partialorder %v1883, 8.507059e+37
  %v1885 = vand.u32 %v1732, 2147483648
  %v1886 = vor.u32 1.1754944e-38, %v1885
  %v1887 = vsel %vm1884, %v1886, %v1882
  %v1888 = vmul.f32 %v1691, %v1887
  %v1889 = vrcp.pop %v1735
  %v1890 = vmul.f32 %v1735, %v1889
  %v1891 = vsub.f32 1.0, %v1890
  %v1892 = vmul.f32 %v1889, %v1891
  %v1893 = vadd.f32 %v1889, %v1892
  %vm1894 = vweird.f32 %v1735
  %vm1895 = vweird.f32 %v1889
  %vm1896 = vmor %vm1894, %vm1895
  %v1897 = vsel %vm1896, %v1889, %v1893
  %v1898 = vand.u32 2147483647, %v1735
  %vm1899 = vcmp.eq.f32.partialorder %v1898, 8.507059e+37
  %v1900 = vand.u32 %v1735, 2147483648
  %v1901 = vor.u32 1.1754944e-38, %v1900
  %v1902 = vsel %vm1899, %v1901, %v1897
  %v1903 = vmul.f32 %v1693, %v1902
  %v1904 = vrcp.pop %v1738
  %v1905 = vmul.f32 %v1738, %v1904
  %v1906 = vsub.f32 1.0, %v1905
  %v1907 = vmul.f32 %v1904, %v1906
  %v1908 = vadd.f32 %v1904, %v1907
  %vm1909 = vweird.f32 %v1738
  %vm1910 = vweird.f32 %v1904
  %vm1911 = vmor %vm1909, %vm1910
  %v1912 = vsel %vm1911, %v1904, %v1908
  %v1913 = vand.u32 2147483647, %v1738
  %vm1914 = vcmp.eq.f32.partialorder %v1913, 8.507059e+37
  %v1915 = vand.u32 %v1738, 2147483648
  %v1916 = vor.u32 1.1754944e-38, %v1915
  %v1917 = vsel %vm1914, %v1916, %v1912
  %v1918 = vmul.f32 %v1695, %v1917
  %v1919 = vrcp.pop %v1741
  %v1920 = vmul.f32 %v1741, %v1919
  %v1921 = vsub.f32 1.0, %v1920
  %v1922 = vmul.f32 %v1919, %v1921
  %v1923 = vadd.f32 %v1919, %v1922
  %vm1924 = vweird.f32 %v1741
  %vm1925 = vweird.f32 %v1919
  %vm1926 = vmor %vm1924, %vm1925
  %v1927 = vsel %vm1926, %v1919, %v1923
  %v1928 = vand.u32 2147483647, %v1741
  %vm1929 = vcmp.eq.f32.partialorder %v1928, 8.507059e+37
  %v1930 = vand.u32 %v1741, 2147483648
  %v1931 = vor.u32 1.1754944e-38, %v1930
  %v1932 = vsel %vm1929, %v1931, %v1927
  %v1933 = vmul.f32 %v1697, %v1932
  %v1934 = vrcp.pop %v1744
  %v1935 = vmul.f32 %v1744, %v1934
  %v1936 = vsub.f32 1.0, %v1935
  %v1937 = vmul.f32 %v1934, %v1936
  %v1938 = vadd.f32 %v1934, %v1937
  %vm1939 = vweird.f32 %v1744
  %vm1940 = vweird.f32 %v1934
  %vm1941 = vmor %vm1939, %vm1940
  %v1942 = vsel %vm1941, %v1934, %v1938
  %v1943 = vand.u32 2147483647, %v1744
  %vm1944 = vcmp.eq.f32.partialorder %v1943, 8.507059e+37
  %v1945 = vand.u32 %v1744, 2147483648
  %v1946 = vor.u32 1.1754944e-38, %v1945
  %v1947 = vsel %vm1944, %v1946, %v1942
  %v1948 = vmul.f32 %v1699, %v1947
  %v1949 = vrcp.pop %v1747
  %v1950 = vmul.f32 %v1747, %v1949
  %v1951 = vsub.f32 1.0, %v1950
  %v1952 = vmul.f32 %v1949, %v1951
  %v1953 = vadd.f32 %v1949, %v1952
  %vm1954 = vweird.f32 %v1747
  %vm1955 = vweird.f32 %v1949
  %vm1956 = vmor %vm1954, %vm1955
  %v1957 = vsel %vm1956, %v1949, %v1953
  %v1958 = vand.u32 2147483647, %v1747
  %vm1959 = vcmp.eq.f32.partialorder %v1958, 8.507059e+37
  %v1960 = vand.u32 %v1747, 2147483648
  %v1961 = vor.u32 1.1754944e-38, %v1960
  %v1962 = vsel %vm1959, %v1961, %v1957
  %v1963 = vmul.f32 %v1701, %v1962
  %v1964 = vrcp.pop %v1750
  %v1965 = vmul.f32 %v1750, %v1964
  %v1966 = vsub.f32 1.0, %v1965
  %v1967 = vmul.f32 %v1964, %v1966
  %v1968 = vadd.f32 %v1964, %v1967
  %vm1969 = vweird.f32 %v1750
  %vm1970 = vweird.f32 %v1964
  %vm1971 = vmor %vm1969, %vm1970
  %v1972 = vsel %vm1971, %v1964, %v1968
  %v1973 = vand.u32 2147483647, %v1750
  %vm1974 = vcmp.eq.f32.partialorder %v1973, 8.507059e+37
  %v1975 = vand.u32 %v1750, 2147483648
  %v1976 = vor.u32 1.1754944e-38, %v1975
  %v1977 = vsel %vm1974, %v1976, %v1972
  %v1978 = vmul.f32 %v1703, %v1977
  %v1979 = vrcp.pop %v1753
  %v1980 = vmul.f32 %v1753, %v1979
  %v1981 = vsub.f32 1.0, %v1980
  %v1982 = vmul.f32 %v1979, %v1981
  %v1983 = vadd.f32 %v1979, %v1982
  %vm1984 = vweird.f32 %v1753
  %vm1985 = vweird.f32 %v1979
  %vm1986 = vmor %vm1984, %vm1985
  %v1987 = vsel %vm1986, %v1979, %v1983
  %v1988 = vand.u32 2147483647, %v1753
  %vm1989 = vcmp.eq.f32.partialorder %v1988, 8.507059e+37
  %v1990 = vand.u32 %v1753, 2147483648
  %v1991 = vor.u32 1.1754944e-38, %v1990
  %v1992 = vsel %vm1989, %v1991, %v1987
  %v1993 = vmul.f32 %v1705, %v1992
  %1994 = vst.msk [vmem:[%s9] sm:$0xff] %vm1609, %v1768
  %1995 = vst.msk [vmem:[%s9 + $0x8] sm:$0xff] %vm1609, %v1783
  %1996 = vst.msk [vmem:[%s9 + $0x10] sm:$0xff] %vm1609, %v1798
  %1997 = vst.msk [vmem:[%s9 + $0x18] sm:$0xff] %vm1609, %v1813
  %1998 = vst.msk [vmem:[%s9 + $0x20] sm:$0xff] %vm1609, %v1828
  %1999 = vst.msk [vmem:[%s9 + $0x28] sm:$0xff] %vm1609, %v1843
  %2000 = vst.msk [vmem:[%s9 + $0x30] sm:$0xff] %vm1609, %v1858
  %2001 = vst.msk [vmem:[%s9 + $0x38] sm:$0xff] %vm1609, %v1873
  %2002 = vst.msk [vmem:[%s9 + $0x40] sm:$0xff] %vm1609, %v1888
  %2003 = vst.msk [vmem:[%s9 + $0x48] sm:$0xff] %vm1609, %v1903
  %2004 = vst.msk [vmem:[%s9 + $0x50] sm:$0xff] %vm1609, %v1918
  %2005 = vst.msk [vmem:[%s9 + $0x58] sm:$0xff] %vm1609, %v1933
  %2006 = vst.msk [vmem:[%s9 + $0x60] sm:$0xff] %vm1609, %v1948
  %2007 = vst.msk [vmem:[%s9 + $0x68] sm:$0xff] %vm1609, %v1963
  %2008 = vst.msk [vmem:[%s9 + $0x70] sm:$0xff] %vm1609, %v1978
  %2009 = vst.msk [vmem:[%s9 + $0x78] sm:$0xff] %vm1609, %v1993
  // Predicated region
  $region38: #{deephit_forward.1} parent=0 // pred_check
    _
  $region39: #{deephit_forward.1} parent=0 // pred_check_branch
    %2011 = sbr.rel (0) target = $region41
  $region40: #{deephit_forward.1} parent=0 // pred_region
    _
  $region41: #{deephit_forward.1} parent=0 // pred_fallthru
    _
  // Predicated region
  $region42: #{deephit_forward.1} parent=0 // pred_check
    _
  $region43: #{deephit_forward.1} parent=0 // pred_check_branch
    %2013 = sbr.rel (0) target = $region45
  $region44: #{deephit_forward.1} parent=0 // pred_region
    _
  $region45: #{deephit_forward.1} parent=0 // pred_fallthru
    _

</llo_original>
